<compile_context>
chip_gen: v5e
topology: v5e:2x2
jax: 0.10.0
libtpu: 0.0.40
codegen_flags: <defaults>
</compile_context>

<pallas_src>
import functools

import jax
import jax.numpy as jnp
from jax.experimental import pallas as pl
from jax.experimental.pallas import tpu as pltpu


def gru_fc_kernel(x_ref,
                  wih0_ref, whh0_ref, bih0_ref, bhh0_ref,
                  wih1_ref, whh1_ref, bih1_ref, bhh1_ref,
                  wfc_ref, bfc_ref,
                  out_ref,
                  gi0_scr,
                  *, seq_len, batch, hidden):
    """2-layer GRU over the full sequence + Linear on the last hidden state."""
    T, B, H = seq_len, batch, hidden

    # ---- Hoist every weight / bias load out of the recurrence (read once) ---
    whh0 = whh0_ref[...]          # (H, 3H)
    wih1 = wih1_ref[...]          # (H, 3H)
    whh1 = whh1_ref[...]          # (H, 3H)
    bhh0 = bhh0_ref[...]          # (1, 3H)  n-slice is b_hn0 (scaled by r)
    bih1 = bih1_ref[...]          # (1, 3H)
    bhh1 = bhh1_ref[...]          # (1, 3H)

    # Pre-fold layer-1 r/z biases; n-gate biases must stay separate because
    # b_hn is multiplied by the reset gate.
    b_r1 = bih1[:, 0:H] + bhh1[:, 0:H]
    b_z1 = bih1[:, H:2 * H] + bhh1[:, H:2 * H]
    b_in1 = bih1[:, 2 * H:3 * H]
    b_hn1 = bhh1[:, 2 * H:3 * H]

    # ---- Layer-0 input projection for ALL time steps: one batched matmul ----
    # x_ref holds time-major rows (T*B, I); this removes one MXU push + bias
    # broadcast per step from the serial dependency chain.
    gi0_scr[...] = (jnp.dot(x_ref[...], wih0_ref[...],
                            preferred_element_type=jnp.float32)
                    + bih0_ref[...])

    # NOTE: gate slices at H-lane offsets are fine at H=32; for scaled H use a
    # gate-major weight layout so each gate lands in its own lane-aligned tile.
    def step(t, carry):
        h0, h1 = carry

        # ---- layer 0 (gi0 already contains b_ih0) ----
        # PyTorch GRU cell, gate order [r, z, n]:
        #   r = sigmoid(W_ir x + b_ir + W_hr h + b_hr)
        #   z = sigmoid(W_iz x + b_iz + W_hz h + b_hz)
        #   n = tanh   (W_in x + b_in + r * (W_hn h + b_hn))
        #   h = (1 - z) * n + z * h_prev
        gi0 = gi0_scr[pl.ds(t * B, B), :]                            # (B, 3H)
        gh0 = jnp.dot(h0, whh0, preferred_element_type=jnp.float32) + bhh0
        r0 = jax.nn.sigmoid(gi0[:, 0:H] + gh0[:, 0:H])
        z0 = jax.nn.sigmoid(gi0[:, H:2 * H] + gh0[:, H:2 * H])
        n0 = jnp.tanh(gi0[:, 2 * H:3 * H] + r0 * gh0[:, 2 * H:3 * H])
        h0 = (1.0 - z0) * n0 + z0 * h0

        # ---- layer 1 (biases pre-folded above) ----
        gi1 = jnp.dot(h0, wih1, preferred_element_type=jnp.float32)
        gh1 = jnp.dot(h1, whh1, preferred_element_type=jnp.float32)
        r1 = jax.nn.sigmoid(gi1[:, 0:H] + gh1[:, 0:H] + b_r1)
        z1 = jax.nn.sigmoid(gi1[:, H:2 * H] + gh1[:, H:2 * H] + b_z1)
        n1 = jnp.tanh(gi1[:, 2 * H:3 * H] + b_in1
                      + r1 * (gh1[:, 2 * H:3 * H] + b_hn1))
        h1 = (1.0 - z1) * n1 + z1 * h1
        return (h0, h1)

    # Hidden states stay in vregs via the loop carry; fully unrolled (T static).
    h_init = (jnp.zeros((B, H), jnp.float32), jnp.zeros((B, H), jnp.float32))
    _, h1_last = jax.lax.fori_loop(0, T, step, h_init, unroll=True)

    # fc(out[:, -1, :]) : last-time-step hidden of the top layer
    out_ref[...] = (jnp.dot(h1_last, wfc_ref[...],
                            preferred_element_type=jnp.float32)
                    + bfc_ref[...]).astype(out_ref.dtype)


@functools.partial(jax.jit, static_argnames=("hidden_size", "num_classes"))
def random_number_gru_forward(x, params, *, hidden_size, num_classes):
    """x: (B, T, input_size) float32 (PyTorch batch_first layout)."""
    B, T, I = x.shape
    H = hidden_size
    C = num_classes

    # Time-major rows (T*B, I): row block [t*B : t*B+B] is time step t.
    # (Transpose cost is negligible at these sizes; for large T*B*I switch x
    #  to a grid axis / manual DMA instead.)
    x_flat = jnp.transpose(x, (1, 0, 2)).reshape(T * B, I)

    vmem = pl.BlockSpec(memory_space=pltpu.MemorySpace.VMEM)
    n_inputs = 11

    kernel = functools.partial(gru_fc_kernel, seq_len=T, batch=B, hidden=H)

    out = pl.pallas_call(
        kernel,
        out_shape=jax.ShapeDtypeStruct((B, C), jnp.float32),
        in_specs=[vmem] * n_inputs,
        out_specs=vmem,
        scratch_shapes=[
            pltpu.VMEM((T * B, 3 * H), jnp.float32),  # precomputed layer-0 gi
        ],
    )(
        x_flat,
        params["wih0"], params["whh0"], params["bih0"], params["bhh0"],
        params["wih1"], params["whh1"], params["bih1"], params["bhh1"],
        params["wfc"], params["bfc"],
    )
    return out


def init_params(key, input_size, hidden_size, num_classes):
    """Deterministic init. Shapes mirror nn.GRU/nn.Linear (pre-transposed)."""
    H, I, C = hidden_size, input_size, num_classes
    ks = jax.random.split(key, 11)
    scale = 1.0 / jnp.sqrt(jnp.float32(H))
    u = lambda k, shp: jax.random.uniform(k, shp, jnp.float32, -scale, scale)
    return {
        # layer 0: weight_ih_l0 (3H, I) stored transposed as (I, 3H), etc.
        "wih0": u(ks[0], (I, 3 * H)),
        "whh0": u(ks[1], (H, 3 * H)),
        "bih0": u(ks[2], (1, 3 * H)),
        "bhh0": u(ks[3], (1, 3 * H)),
        # layer 1: input dim is H
        "wih1": u(ks[4], (H, 3 * H)),
        "whh1": u(ks[5], (H, 3 * H)),
        "bih1": u(ks[6], (1, 3 * H)),
        "bhh1": u(ks[7], (1, 3 * H)),
        # fc: nn.Linear(H, C) weight (C, H) stored transposed as (H, C)
        "wfc": u(ks[8], (H, C)),
        "bfc": u(ks[9], (1, C)),
    }


def reference_forward(x, params, hidden_size):
    """Pure-JAX reference (scan over time) for correctness checking."""
    H = hidden_size
    B, T, _ = x.shape

    def cell(x_t, h_prev, wih, whh, bih, bhh):
        gi = x_t @ wih + bih
        gh = h_prev @ whh + bhh
        i_r, i_z, i_n = gi[:, :H], gi[:, H:2 * H], gi[:, 2 * H:]
        h_r, h_z, h_n = gh[:, :H], gh[:, H:2 * H], gh[:, 2 * H:]
        r = jax.nn.sigmoid(i_r + h_r)
        z = jax.nn.sigmoid(i_z + h_z)
        n = jnp.tanh(i_n + r * h_n)
        return (1.0 - z) * n + z * h_prev

    def step(carry, x_t):
        h0, h1 = carry
        h0 = cell(x_t, h0, params["wih0"], params["whh0"],
                  params["bih0"], params["bhh0"])
        h1 = cell(h0, h1, params["wih1"], params["whh1"],
                  params["bih1"], params["bhh1"])
        return (h0, h1), None

    init = (jnp.zeros((B, H), jnp.float32), jnp.zeros((B, H), jnp.float32))
    (h0, h1), _ = jax.lax.scan(step, init, jnp.transpose(x, (1, 0, 2)))
    return h1 @ params["wfc"] + params["bfc"]


if __name__ == "__main__":
    input_size = 8
    hidden_size = 32
    num_classes = 16
    batch, seq = 2, 8

    key = jax.random.PRNGKey(0)
    k_x, k_p = jax.random.split(key)
    x = jax.random.normal(k_x, (batch, seq, input_size), jnp.float32)
    params = init_params(k_p, input_size, hidden_size, num_classes)

    out = random_number_gru_forward(
        x, params, hidden_size=hidden_size, num_classes=num_classes)
    out = jax.block_until_ready(out)

    ref = reference_forward(x, params, hidden_size)
    assert out.shape == (batch, num_classes)
    assert jnp.allclose(out, ref, atol=1e-5, rtol=1e-5)

    print("KERNEL_OK")
</pallas_src>

<mosaic_0001>
module attributes {stable_mosaic.version = 11 : i64} {
  func.func @gru_fc_kernel(%arg0: memref<16x8xf32, #tpu.memory_space<vmem>>, %arg1: memref<8x96xf32, #tpu.memory_space<vmem>>, %arg2: memref<32x96xf32, #tpu.memory_space<vmem>>, %arg3: memref<1x96xf32, #tpu.memory_space<vmem>>, %arg4: memref<1x96xf32, #tpu.memory_space<vmem>>, %arg5: memref<32x96xf32, #tpu.memory_space<vmem>>, %arg6: memref<32x96xf32, #tpu.memory_space<vmem>>, %arg7: memref<1x96xf32, #tpu.memory_space<vmem>>, %arg8: memref<1x96xf32, #tpu.memory_space<vmem>>, %arg9: memref<32x16xf32, #tpu.memory_space<vmem>>, %arg10: memref<1x16xf32, #tpu.memory_space<vmem>>, %arg11: memref<2x16xf32, #tpu.memory_space<vmem>>, %arg12: memref<16x96xf32, #tpu.memory_space<vmem>>) attributes {dimension_semantics = [], scalar_prefetch = 0 : i64, scratch_operands = 1 : i64, tpu.core_type = #tpu.core_type<tc>} {
    %c0 = arith.constant 0 : index
    %c0_0 = arith.constant 0 : index
    %0 = vector.load %arg2[%c0, %c0_0] : memref<32x96xf32, #tpu.memory_space<vmem>>, vector<32x96xf32>
    %c0_1 = arith.constant 0 : index
    %c0_2 = arith.constant 0 : index
    %1 = vector.load %arg5[%c0_1, %c0_2] : memref<32x96xf32, #tpu.memory_space<vmem>>, vector<32x96xf32>
    %c0_3 = arith.constant 0 : index
    %c0_4 = arith.constant 0 : index
    %2 = vector.load %arg6[%c0_3, %c0_4] : memref<32x96xf32, #tpu.memory_space<vmem>>, vector<32x96xf32>
    %c0_5 = arith.constant 0 : index
    %c0_6 = arith.constant 0 : index
    %3 = vector.load %arg4[%c0_5, %c0_6] : memref<1x96xf32, #tpu.memory_space<vmem>>, vector<1x96xf32>
    %c0_7 = arith.constant 0 : index
    %c0_8 = arith.constant 0 : index
    %4 = vector.load %arg7[%c0_7, %c0_8] : memref<1x96xf32, #tpu.memory_space<vmem>>, vector<1x96xf32>
    %c0_9 = arith.constant 0 : index
    %c0_10 = arith.constant 0 : index
    %5 = vector.load %arg8[%c0_9, %c0_10] : memref<1x96xf32, #tpu.memory_space<vmem>>, vector<1x96xf32>
    %6 = vector.extract_strided_slice %4 {offsets = [0, 0], sizes = [1, 32], strides = [1, 1]} : vector<1x96xf32> to vector<1x32xf32>
    %7 = vector.extract_strided_slice %5 {offsets = [0, 0], sizes = [1, 32], strides = [1, 1]} : vector<1x96xf32> to vector<1x32xf32>
    %8 = arith.addf %6, %7 : vector<1x32xf32>
    %9 = vector.extract_strided_slice %4 {offsets = [0, 32], sizes = [1, 32], strides = [1, 1]} : vector<1x96xf32> to vector<1x32xf32>
    %10 = vector.extract_strided_slice %5 {offsets = [0, 32], sizes = [1, 32], strides = [1, 1]} : vector<1x96xf32> to vector<1x32xf32>
    %11 = arith.addf %9, %10 : vector<1x32xf32>
    %12 = vector.extract_strided_slice %4 {offsets = [0, 64], sizes = [1, 32], strides = [1, 1]} : vector<1x96xf32> to vector<1x32xf32>
    %13 = vector.extract_strided_slice %5 {offsets = [0, 64], sizes = [1, 32], strides = [1, 1]} : vector<1x96xf32> to vector<1x32xf32>
    %c0_11 = arith.constant 0 : index
    %c0_12 = arith.constant 0 : index
    %14 = vector.load %arg0[%c0_11, %c0_12] : memref<16x8xf32, #tpu.memory_space<vmem>>, vector<16x8xf32>
    %c0_13 = arith.constant 0 : index
    %c0_14 = arith.constant 0 : index
    %15 = vector.load %arg1[%c0_13, %c0_14] : memref<8x96xf32, #tpu.memory_space<vmem>>, vector<8x96xf32>
    %cst = arith.constant dense<0.000000e+00> : vector<16x96xf32>
    %16 = tpu.matmul %14, %15, %cst {dimension_numbers = #tpu.dot_dimension_numbers<[1], [0], [0], [1], [0, 0, 1, 1], [], []>} : vector<16x8xf32>, vector<8x96xf32>, vector<16x96xf32> -> vector<16x96xf32>
    %c0_15 = arith.constant 0 : index
    %c0_16 = arith.constant 0 : index
    %17 = vector.load %arg3[%c0_15, %c0_16] : memref<1x96xf32, #tpu.memory_space<vmem>>, vector<1x96xf32>
    %18 = vector.broadcast %17 : vector<1x96xf32> to vector<16x96xf32>
    %19 = arith.addf %16, %18 : vector<16x96xf32>
    %c0_17 = arith.constant 0 : index
    %c0_18 = arith.constant 0 : index
    %20 = vector.load %arg12[%c0_17, %c0_18] : memref<16x96xf32, #tpu.memory_space<vmem>>, vector<16x96xf32>
    tpu.vector_store %arg12[%c0_17, %c0_18], %19 {strides = array<i32>} : memref<16x96xf32, #tpu.memory_space<vmem>>, vector<16x96xf32>,
    %cst_19 = arith.constant 0.000000e+00 : f32
    %21 = vector.broadcast %cst_19 : f32 to vector<2x32xf32>
    %cst_20 = arith.constant 0.000000e+00 : f32
    %22 = vector.broadcast %cst_20 : f32 to vector<2x32xf32>
    %c0_i32 = arith.constant 0 : i32
    %c2_i32 = arith.constant 2 : i32
    %23 = arith.muli %c0_i32, %c2_i32 : i32
    %24 = arith.index_cast %23 : i32 to index
    %c0_21 = arith.constant 0 : index
    %25 = vector.load %arg12[%24, %c0_21] : memref<16x96xf32, #tpu.memory_space<vmem>>, vector<2x96xf32>
    %cst_22 = arith.constant dense<0.000000e+00> : vector<2x96xf32>
    %26 = tpu.matmul %21, %0, %cst_22 {dimension_numbers = #tpu.dot_dimension_numbers<[1], [0], [0], [1], [0, 0, 1, 1], [], []>} : vector<2x32xf32>, vector<32x96xf32>, vector<2x96xf32> -> vector<2x96xf32>
    %27 = vector.broadcast %3 : vector<1x96xf32> to vector<2x96xf32>
    %28 = arith.addf %26, %27 : vector<2x96xf32>
    %29 = vector.extract_strided_slice %25 {offsets = [0, 0], sizes = [2, 32], strides = [1, 1]} : vector<2x96xf32> to vector<2x32xf32>
    %30 = vector.extract_strided_slice %28 {offsets = [0, 0], sizes = [2, 32], strides = [1, 1]} : vector<2x96xf32> to vector<2x32xf32>
    %31 = arith.addf %29, %30 : vector<2x32xf32>
    %32 = arith.negf %31 : vector<2x32xf32>
    %33 = math.exp %32 : vector<2x32xf32>
    %cst_23 = arith.constant 1.000000e+00 : f32
    %34 = vector.broadcast %cst_23 : f32 to vector<2x32xf32>
    %35 = arith.addf %34, %33 : vector<2x32xf32>
    %36 = arith.divf %34, %35 : vector<2x32xf32>
    %37 = vector.extract_strided_slice %25 {offsets = [0, 32], sizes = [2, 32], strides = [1, 1]} : vector<2x96xf32> to vector<2x32xf32>
    %38 = vector.extract_strided_slice %28 {offsets = [0, 32], sizes = [2, 32], strides = [1, 1]} : vector<2x96xf32> to vector<2x32xf32>
    %39 = arith.addf %37, %38 : vector<2x32xf32>
    %40 = arith.negf %39 : vector<2x32xf32>
    %41 = math.exp %40 : vector<2x32xf32>
    %cst_24 = arith.constant 1.000000e+00 : f32
    %42 = vector.broadcast %cst_24 : f32 to vector<2x32xf32>
    %43 = arith.addf %42, %41 : vector<2x32xf32>
    %44 = arith.divf %42, %43 : vector<2x32xf32>
    %45 = vector.extract_strided_slice %25 {offsets = [0, 64], sizes = [2, 32], strides = [1, 1]} : vector<2x96xf32> to vector<2x32xf32>
    %46 = vector.extract_strided_slice %28 {offsets = [0, 64], sizes = [2, 32], strides = [1, 1]} : vector<2x96xf32> to vector<2x32xf32>
    %47 = arith.mulf %36, %46 : vector<2x32xf32>
    %48 = arith.addf %45, %47 : vector<2x32xf32>
    %49 = math.tanh %48 : vector<2x32xf32>
    %cst_25 = arith.constant 1.000000e+00 : f32
    %50 = vector.broadcast %cst_25 : f32 to vector<2x32xf32>
    %51 = arith.subf %50, %44 : vector<2x32xf32>
    %52 = arith.mulf %51, %49 : vector<2x32xf32>
    %53 = arith.mulf %44, %21 : vector<2x32xf32>
    %54 = arith.addf %52, %53 : vector<2x32xf32>
    %cst_26 = arith.constant dense<0.000000e+00> : vector<2x96xf32>
    %55 = tpu.matmul %54, %1, %cst_26 {dimension_numbers = #tpu.dot_dimension_numbers<[1], [0], [0], [1], [0, 0, 1, 1], [], []>} : vector<2x32xf32>, vector<32x96xf32>, vector<2x96xf32> -> vector<2x96xf32>
    %cst_27 = arith.constant dense<0.000000e+00> : vector<2x96xf32>
    %56 = tpu.matmul %22, %2, %cst_27 {dimension_numbers = #tpu.dot_dimension_numbers<[1], [0], [0], [1], [0, 0, 1, 1], [], []>} : vector<2x32xf32>, vector<32x96xf32>, vector<2x96xf32> -> vector<2x96xf32>
    %57 = vector.extract_strided_slice %55 {offsets = [0, 0], sizes = [2, 32], strides = [1, 1]} : vector<2x96xf32> to vector<2x32xf32>
    %58 = vector.extract_strided_slice %56 {offsets = [0, 0], sizes = [2, 32], strides = [1, 1]} : vector<2x96xf32> to vector<2x32xf32>
    %59 = arith.addf %57, %58 : vector<2x32xf32>
    %60 = vector.broadcast %8 : vector<1x32xf32> to vector<2x32xf32>
    %61 = arith.addf %59, %60 : vector<2x32xf32>
    %62 = arith.negf %61 : vector<2x32xf32>
    %63 = math.exp %62 : vector<2x32xf32>
    %cst_28 = arith.constant 1.000000e+00 : f32
    %64 = vector.broadcast %cst_28 : f32 to vector<2x32xf32>
    %65 = arith.addf %64, %63 : vector<2x32xf32>
    %66 = arith.divf %64, %65 : vector<2x32xf32>
    %67 = vector.extract_strided_slice %55 {offsets = [0, 32], sizes = [2, 32], strides = [1, 1]} : vector<2x96xf32> to vector<2x32xf32>
    %68 = vector.extract_strided_slice %56 {offsets = [0, 32], sizes = [2, 32], strides = [1, 1]} : vector<2x96xf32> to vector<2x32xf32>
    %69 = arith.addf %67, %68 : vector<2x32xf32>
    %70 = vector.broadcast %11 : vector<1x32xf32> to vector<2x32xf32>
    %71 = arith.addf %69, %70 : vector<2x32xf32>
    %72 = arith.negf %71 : vector<2x32xf32>
    %73 = math.exp %72 : vector<2x32xf32>
    %cst_29 = arith.constant 1.000000e+00 : f32
    %74 = vector.broadcast %cst_29 : f32 to vector<2x32xf32>
    %75 = arith.addf %74, %73 : vector<2x32xf32>
    %76 = arith.divf %74, %75 : vector<2x32xf32>
    %77 = vector.extract_strided_slice %55 {offsets = [0, 64], sizes = [2, 32], strides = [1, 1]} : vector<2x96xf32> to vector<2x32xf32>
    %78 = vector.broadcast %12 : vector<1x32xf32> to vector<2x32xf32>
    %79 = arith.addf %77, %78 : vector<2x32xf32>
    %80 = vector.extract_strided_slice %56 {offsets = [0, 64], sizes = [2, 32], strides = [1, 1]} : vector<2x96xf32> to vector<2x32xf32>
    %81 = vector.broadcast %13 : vector<1x32xf32> to vector<2x32xf32>
    %82 = arith.addf %80, %81 : vector<2x32xf32>
    %83 = arith.mulf %66, %82 : vector<2x32xf32>
    %84 = arith.addf %79, %83 : vector<2x32xf32>
    %85 = math.tanh %84 : vector<2x32xf32>
    %cst_30 = arith.constant 1.000000e+00 : f32
    %86 = vector.broadcast %cst_30 : f32 to vector<2x32xf32>
    %87 = arith.subf %86, %76 : vector<2x32xf32>
    %88 = arith.mulf %87, %85 : vector<2x32xf32>
    %89 = arith.mulf %76, %22 : vector<2x32xf32>
    %90 = arith.addf %88, %89 : vector<2x32xf32>
    %c1_i32 = arith.constant 1 : i32
    %c2_i32_31 = arith.constant 2 : i32
    %91 = arith.muli %c1_i32, %c2_i32_31 : i32
    %92 = arith.index_cast %91 : i32 to index
    %c0_32 = arith.constant 0 : index
    %93 = vector.load %arg12[%92, %c0_32] : memref<16x96xf32, #tpu.memory_space<vmem>>, vector<2x96xf32>
    %cst_33 = arith.constant dense<0.000000e+00> : vector<2x96xf32>
    %94 = tpu.matmul %54, %0, %cst_33 {dimension_numbers = #tpu.dot_dimension_numbers<[1], [0], [0], [1], [0, 0, 1, 1], [], []>} : vector<2x32xf32>, vector<32x96xf32>, vector<2x96xf32> -> vector<2x96xf32>
    %95 = vector.broadcast %3 : vector<1x96xf32> to vector<2x96xf32>
    %96 = arith.addf %94, %95 : vector<2x96xf32>
    %97 = vector.extract_strided_slice %93 {offsets = [0, 0], sizes = [2, 32], strides = [1, 1]} : vector<2x96xf32> to vector<2x32xf32>
    %98 = vector.extract_strided_slice %96 {offsets = [0, 0], sizes = [2, 32], strides = [1, 1]} : vector<2x96xf32> to vector<2x32xf32>
    %99 = arith.addf %97, %98 : vector<2x32xf32>
    %100 = arith.negf %99 : vector<2x32xf32>
    %101 = math.exp %100 : vector<2x32xf32>
    %cst_34 = arith.constant 1.000000e+00 : f32
    %102 = vector.broadcast %cst_34 : f32 to vector<2x32xf32>
    %103 = arith.addf %102, %101 : vector<2x32xf32>
    %104 = arith.divf %102, %103 : vector<2x32xf32>
    %105 = vector.extract_strided_slice %93 {offsets = [0, 32], sizes = [2, 32], strides = [1, 1]} : vector<2x96xf32> to vector<2x32xf32>
    %106 = vector.extract_strided_slice %96 {offsets = [0, 32], sizes = [2, 32], strides = [1, 1]} : vector<2x96xf32> to vector<2x32xf32>
    %107 = arith.addf %105, %106 : vector<2x32xf32>
    %108 = arith.negf %107 : vector<2x32xf32>
    %109 = math.exp %108 : vector<2x32xf32>
    %cst_35 = arith.constant 1.000000e+00 : f32
    %110 = vector.broadcast %cst_35 : f32 to vector<2x32xf32>
    %111 = arith.addf %110, %109 : vector<2x32xf32>
    %112 = arith.divf %110, %111 : vector<2x32xf32>
    %113 = vector.extract_strided_slice %93 {offsets = [0, 64], sizes = [2, 32], strides = [1, 1]} : vector<2x96xf32> to vector<2x32xf32>
    %114 = vector.extract_strided_slice %96 {offsets = [0, 64], sizes = [2, 32], strides = [1, 1]} : vector<2x96xf32> to vector<2x32xf32>
    %115 = arith.mulf %104, %114 : vector<2x32xf32>
    %116 = arith.addf %113, %115 : vector<2x32xf32>
    %117 = math.tanh %116 : vector<2x32xf32>
    %cst_36 = arith.constant 1.000000e+00 : f32
    %118 = vector.broadcast %cst_36 : f32 to vector<2x32xf32>
    %119 = arith.subf %118, %112 : vector<2x32xf32>
    %120 = arith.mulf %119, %117 : vector<2x32xf32>
    %121 = arith.mulf %112, %54 : vector<2x32xf32>
    %122 = arith.addf %120, %121 : vector<2x32xf32>
    %cst_37 = arith.constant dense<0.000000e+00> : vector<2x96xf32>
    %123 = tpu.matmul %122, %1, %cst_37 {dimension_numbers = #tpu.dot_dimension_numbers<[1], [0], [0], [1], [0, 0, 1, 1], [], []>} : vector<2x32xf32>, vector<32x96xf32>, vector<2x96xf32> -> vector<2x96xf32>
    %cst_38 = arith.constant dense<0.000000e+00> : vector<2x96xf32>
    %124 = tpu.matmul %90, %2, %cst_38 {dimension_numbers = #tpu.dot_dimension_numbers<[1], [0], [0], [1], [0, 0, 1, 1], [], []>} : vector<2x32xf32>, vector<32x96xf32>, vector<2x96xf32> -> vector<2x96xf32>
    %125 = vector.extract_strided_slice %123 {offsets = [0, 0], sizes = [2, 32], strides = [1, 1]} : vector<2x96xf32> to vector<2x32xf32>
    %126 = vector.extract_strided_slice %124 {offsets = [0, 0], sizes = [2, 32], strides = [1, 1]} : vector<2x96xf32> to vector<2x32xf32>
    %127 = arith.addf %125, %126 : vector<2x32xf32>
    %128 = vector.broadcast %8 : vector<1x32xf32> to vector<2x32xf32>
    %129 = arith.addf %127, %128 : vector<2x32xf32>
    %130 = arith.negf %129 : vector<2x32xf32>
    %131 = math.exp %130 : vector<2x32xf32>
    %cst_39 = arith.constant 1.000000e+00 : f32
    %132 = vector.broadcast %cst_39 : f32 to vector<2x32xf32>
    %133 = arith.addf %132, %131 : vector<2x32xf32>
    %134 = arith.divf %132, %133 : vector<2x32xf32>
    %135 = vector.extract_strided_slice %123 {offsets = [0, 32], sizes = [2, 32], strides = [1, 1]} : vector<2x96xf32> to vector<2x32xf32>
    %136 = vector.extract_strided_slice %124 {offsets = [0, 32], sizes = [2, 32], strides = [1, 1]} : vector<2x96xf32> to vector<2x32xf32>
    %137 = arith.addf %135, %136 : vector<2x32xf32>
    %138 = vector.broadcast %11 : vector<1x32xf32> to vector<2x32xf32>
    %139 = arith.addf %137, %138 : vector<2x32xf32>
    %140 = arith.negf %139 : vector<2x32xf32>
    %141 = math.exp %140 : vector<2x32xf32>
    %cst_40 = arith.constant 1.000000e+00 : f32
    %142 = vector.broadcast %cst_40 : f32 to vector<2x32xf32>
    %143 = arith.addf %142, %141 : vector<2x32xf32>
    %144 = arith.divf %142, %143 : vector<2x32xf32>
    %145 = vector.extract_strided_slice %123 {offsets = [0, 64], sizes = [2, 32], strides = [1, 1]} : vector<2x96xf32> to vector<2x32xf32>
    %146 = vector.broadcast %12 : vector<1x32xf32> to vector<2x32xf32>
    %147 = arith.addf %145, %146 : vector<2x32xf32>
    %148 = vector.extract_strided_slice %124 {offsets = [0, 64], sizes = [2, 32], strides = [1, 1]} : vector<2x96xf32> to vector<2x32xf32>
    %149 = vector.broadcast %13 : vector<1x32xf32> to vector<2x32xf32>
    %150 = arith.addf %148, %149 : vector<2x32xf32>
    %151 = arith.mulf %134, %150 : vector<2x32xf32>
    %152 = arith.addf %147, %151 : vector<2x32xf32>
    %153 = math.tanh %152 : vector<2x32xf32>
    %cst_41 = arith.constant 1.000000e+00 : f32
    %154 = vector.broadcast %cst_41 : f32 to vector<2x32xf32>
    %155 = arith.subf %154, %144 : vector<2x32xf32>
    %156 = arith.mulf %155, %153 : vector<2x32xf32>
    %157 = arith.mulf %144, %90 : vector<2x32xf32>
    %158 = arith.addf %156, %157 : vector<2x32xf32>
    %c2_i32_42 = arith.constant 2 : i32
    %c2_i32_43 = arith.constant 2 : i32
    %159 = arith.muli %c2_i32_42, %c2_i32_43 : i32
    %160 = arith.index_cast %159 : i32 to index
    %c0_44 = arith.constant 0 : index
    %161 = vector.load %arg12[%160, %c0_44] : memref<16x96xf32, #tpu.memory_space<vmem>>, vector<2x96xf32>
    %cst_45 = arith.constant dense<0.000000e+00> : vector<2x96xf32>
    %162 = tpu.matmul %122, %0, %cst_45 {dimension_numbers = #tpu.dot_dimension_numbers<[1], [0], [0], [1], [0, 0, 1, 1], [], []>} : vector<2x32xf32>, vector<32x96xf32>, vector<2x96xf32> -> vector<2x96xf32>
    %163 = vector.broadcast %3 : vector<1x96xf32> to vector<2x96xf32>
    %164 = arith.addf %162, %163 : vector<2x96xf32>
    %165 = vector.extract_strided_slice %161 {offsets = [0, 0], sizes = [2, 32], strides = [1, 1]} : vector<2x96xf32> to vector<2x32xf32>
    %166 = vector.extract_strided_slice %164 {offsets = [0, 0], sizes = [2, 32], strides = [1, 1]} : vector<2x96xf32> to vector<2x32xf32>
    %167 = arith.addf %165, %166 : vector<2x32xf32>
    %168 = arith.negf %167 : vector<2x32xf32>
    %169 = math.exp %168 : vector<2x32xf32>
    %cst_46 = arith.constant 1.000000e+00 : f32
    %170 = vector.broadcast %cst_46 : f32 to vector<2x32xf32>
    %171 = arith.addf %170, %169 : vector<2x32xf32>
    %172 = arith.divf %170, %171 : vector<2x32xf32>
    %173 = vector.extract_strided_slice %161 {offsets = [0, 32], sizes = [2, 32], strides = [1, 1]} : vector<2x96xf32> to vector<2x32xf32>
    %174 = vector.extract_strided_slice %164 {offsets = [0, 32], sizes = [2, 32], strides = [1, 1]} : vector<2x96xf32> to vector<2x32xf32>
    %175 = arith.addf %173, %174 : vector<2x32xf32>
    %176 = arith.negf %175 : vector<2x32xf32>
    %177 = math.exp %176 : vector<2x32xf32>
    %cst_47 = arith.constant 1.000000e+00 : f32
    %178 = vector.broadcast %cst_47 : f32 to vector<2x32xf32>
    %179 = arith.addf %178, %177 : vector<2x32xf32>
    %180 = arith.divf %178, %179 : vector<2x32xf32>
    %181 = vector.extract_strided_slice %161 {offsets = [0, 64], sizes = [2, 32], strides = [1, 1]} : vector<2x96xf32> to vector<2x32xf32>
    %182 = vector.extract_strided_slice %164 {offsets = [0, 64], sizes = [2, 32], strides = [1, 1]} : vector<2x96xf32> to vector<2x32xf32>
    %183 = arith.mulf %172, %182 : vector<2x32xf32>
    %184 = arith.addf %181, %183 : vector<2x32xf32>
    %185 = math.tanh %184 : vector<2x32xf32>
    %cst_48 = arith.constant 1.000000e+00 : f32
    %186 = vector.broadcast %cst_48 : f32 to vector<2x32xf32>
    %187 = arith.subf %186, %180 : vector<2x32xf32>
    %188 = arith.mulf %187, %185 : vector<2x32xf32>
    %189 = arith.mulf %180, %122 : vector<2x32xf32>
    %190 = arith.addf %188, %189 : vector<2x32xf32>
    %cst_49 = arith.constant dense<0.000000e+00> : vector<2x96xf32>
    %191 = tpu.matmul %190, %1, %cst_49 {dimension_numbers = #tpu.dot_dimension_numbers<[1], [0], [0], [1], [0, 0, 1, 1], [], []>} : vector<2x32xf32>, vector<32x96xf32>, vector<2x96xf32> -> vector<2x96xf32>
    %cst_50 = arith.constant dense<0.000000e+00> : vector<2x96xf32>
    %192 = tpu.matmul %158, %2, %cst_50 {dimension_numbers = #tpu.dot_dimension_numbers<[1], [0], [0], [1], [0, 0, 1, 1], [], []>} : vector<2x32xf32>, vector<32x96xf32>, vector<2x96xf32> -> vector<2x96xf32>
    %193 = vector.extract_strided_slice %191 {offsets = [0, 0], sizes = [2, 32], strides = [1, 1]} : vector<2x96xf32> to vector<2x32xf32>
    %194 = vector.extract_strided_slice %192 {offsets = [0, 0], sizes = [2, 32], strides = [1, 1]} : vector<2x96xf32> to vector<2x32xf32>
    %195 = arith.addf %193, %194 : vector<2x32xf32>
    %196 = vector.broadcast %8 : vector<1x32xf32> to vector<2x32xf32>
    %197 = arith.addf %195, %196 : vector<2x32xf32>
    %198 = arith.negf %197 : vector<2x32xf32>
    %199 = math.exp %198 : vector<2x32xf32>
    %cst_51 = arith.constant 1.000000e+00 : f32
    %200 = vector.broadcast %cst_51 : f32 to vector<2x32xf32>
    %201 = arith.addf %200, %199 : vector<2x32xf32>
    %202 = arith.divf %200, %201 : vector<2x32xf32>
    %203 = vector.extract_strided_slice %191 {offsets = [0, 32], sizes = [2, 32], strides = [1, 1]} : vector<2x96xf32> to vector<2x32xf32>
    %204 = vector.extract_strided_slice %192 {offsets = [0, 32], sizes = [2, 32], strides = [1, 1]} : vector<2x96xf32> to vector<2x32xf32>
    %205 = arith.addf %203, %204 : vector<2x32xf32>
    %206 = vector.broadcast %11 : vector<1x32xf32> to vector<2x32xf32>
    %207 = arith.addf %205, %206 : vector<2x32xf32>
    %208 = arith.negf %207 : vector<2x32xf32>
    %209 = math.exp %208 : vector<2x32xf32>
    %cst_52 = arith.constant 1.000000e+00 : f32
    %210 = vector.broadcast %cst_52 : f32 to vector<2x32xf32>
    %211 = arith.addf %210, %209 : vector<2x32xf32>
    %212 = arith.divf %210, %211 : vector<2x32xf32>
    %213 = vector.extract_strided_slice %191 {offsets = [0, 64], sizes = [2, 32], strides = [1, 1]} : vector<2x96xf32> to vector<2x32xf32>
    %214 = vector.broadcast %12 : vector<1x32xf32> to vector<2x32xf32>
    %215 = arith.addf %213, %214 : vector<2x32xf32>
    %216 = vector.extract_strided_slice %192 {offsets = [0, 64], sizes = [2, 32], strides = [1, 1]} : vector<2x96xf32> to vector<2x32xf32>
    %217 = vector.broadcast %13 : vector<1x32xf32> to vector<2x32xf32>
    %218 = arith.addf %216, %217 : vector<2x32xf32>
    %219 = arith.mulf %202, %218 : vector<2x32xf32>
    %220 = arith.addf %215, %219 : vector<2x32xf32>
    %221 = math.tanh %220 : vector<2x32xf32>
    %cst_53 = arith.constant 1.000000e+00 : f32
    %222 = vector.broadcast %cst_53 : f32 to vector<2x32xf32>
    %223 = arith.subf %222, %212 : vector<2x32xf32>
    %224 = arith.mulf %223, %221 : vector<2x32xf32>
    %225 = arith.mulf %212, %158 : vector<2x32xf32>
    %226 = arith.addf %224, %225 : vector<2x32xf32>
    %c3_i32 = arith.constant 3 : i32
    %c2_i32_54 = arith.constant 2 : i32
    %227 = arith.muli %c3_i32, %c2_i32_54 : i32
    %228 = arith.index_cast %227 : i32 to index
    %c0_55 = arith.constant 0 : index
    %229 = vector.load %arg12[%228, %c0_55] : memref<16x96xf32, #tpu.memory_space<vmem>>, vector<2x96xf32>
    %cst_56 = arith.constant dense<0.000000e+00> : vector<2x96xf32>
    %230 = tpu.matmul %190, %0, %cst_56 {dimension_numbers = #tpu.dot_dimension_numbers<[1], [0], [0], [1], [0, 0, 1, 1], [], []>} : vector<2x32xf32>, vector<32x96xf32>, vector<2x96xf32> -> vector<2x96xf32>
    %231 = vector.broadcast %3 : vector<1x96xf32> to vector<2x96xf32>
    %232 = arith.addf %230, %231 : vector<2x96xf32>
    %233 = vector.extract_strided_slice %229 {offsets = [0, 0], sizes = [2, 32], strides = [1, 1]} : vector<2x96xf32> to vector<2x32xf32>
    %234 = vector.extract_strided_slice %232 {offsets = [0, 0], sizes = [2, 32], strides = [1, 1]} : vector<2x96xf32> to vector<2x32xf32>
    %235 = arith.addf %233, %234 : vector<2x32xf32>
    %236 = arith.negf %235 : vector<2x32xf32>
    %237 = math.exp %236 : vector<2x32xf32>
    %cst_57 = arith.constant 1.000000e+00 : f32
    %238 = vector.broadcast %cst_57 : f32 to vector<2x32xf32>
    %239 = arith.addf %238, %237 : vector<2x32xf32>
    %240 = arith.divf %238, %239 : vector<2x32xf32>
    %241 = vector.extract_strided_slice %229 {offsets = [0, 32], sizes = [2, 32], strides = [1, 1]} : vector<2x96xf32> to vector<2x32xf32>
    %242 = vector.extract_strided_slice %232 {offsets = [0, 32], sizes = [2, 32], strides = [1, 1]} : vector<2x96xf32> to vector<2x32xf32>
    %243 = arith.addf %241, %242 : vector<2x32xf32>
    %244 = arith.negf %243 : vector<2x32xf32>
    %245 = math.exp %244 : vector<2x32xf32>
    %cst_58 = arith.constant 1.000000e+00 : f32
    %246 = vector.broadcast %cst_58 : f32 to vector<2x32xf32>
    %247 = arith.addf %246, %245 : vector<2x32xf32>
    %248 = arith.divf %246, %247 : vector<2x32xf32>
    %249 = vector.extract_strided_slice %229 {offsets = [0, 64], sizes = [2, 32], strides = [1, 1]} : vector<2x96xf32> to vector<2x32xf32>
    %250 = vector.extract_strided_slice %232 {offsets = [0, 64], sizes = [2, 32], strides = [1, 1]} : vector<2x96xf32> to vector<2x32xf32>
    %251 = arith.mulf %240, %250 : vector<2x32xf32>
    %252 = arith.addf %249, %251 : vector<2x32xf32>
    %253 = math.tanh %252 : vector<2x32xf32>
    %cst_59 = arith.constant 1.000000e+00 : f32
    %254 = vector.broadcast %cst_59 : f32 to vector<2x32xf32>
    %255 = arith.subf %254, %248 : vector<2x32xf32>
    %256 = arith.mulf %255, %253 : vector<2x32xf32>
    %257 = arith.mulf %248, %190 : vector<2x32xf32>
    %258 = arith.addf %256, %257 : vector<2x32xf32>
    %cst_60 = arith.constant dense<0.000000e+00> : vector<2x96xf32>
    %259 = tpu.matmul %258, %1, %cst_60 {dimension_numbers = #tpu.dot_dimension_numbers<[1], [0], [0], [1], [0, 0, 1, 1], [], []>} : vector<2x32xf32>, vector<32x96xf32>, vector<2x96xf32> -> vector<2x96xf32>
    %cst_61 = arith.constant dense<0.000000e+00> : vector<2x96xf32>
    %260 = tpu.matmul %226, %2, %cst_61 {dimension_numbers = #tpu.dot_dimension_numbers<[1], [0], [0], [1], [0, 0, 1, 1], [], []>} : vector<2x32xf32>, vector<32x96xf32>, vector<2x96xf32> -> vector<2x96xf32>
    %261 = vector.extract_strided_slice %259 {offsets = [0, 0], sizes = [2, 32], strides = [1, 1]} : vector<2x96xf32> to vector<2x32xf32>
    %262 = vector.extract_strided_slice %260 {offsets = [0, 0], sizes = [2, 32], strides = [1, 1]} : vector<2x96xf32> to vector<2x32xf32>
    %263 = arith.addf %261, %262 : vector<2x32xf32>
    %264 = vector.broadcast %8 : vector<1x32xf32> to vector<2x32xf32>
    %265 = arith.addf %263, %264 : vector<2x32xf32>
    %266 = arith.negf %265 : vector<2x32xf32>
    %267 = math.exp %266 : vector<2x32xf32>
    %cst_62 = arith.constant 1.000000e+00 : f32
    %268 = vector.broadcast %cst_62 : f32 to vector<2x32xf32>
    %269 = arith.addf %268, %267 : vector<2x32xf32>
    %270 = arith.divf %268, %269 : vector<2x32xf32>
    %271 = vector.extract_strided_slice %259 {offsets = [0, 32], sizes = [2, 32], strides = [1, 1]} : vector<2x96xf32> to vector<2x32xf32>
    %272 = vector.extract_strided_slice %260 {offsets = [0, 32], sizes = [2, 32], strides = [1, 1]} : vector<2x96xf32> to vector<2x32xf32>
    %273 = arith.addf %271, %272 : vector<2x32xf32>
    %274 = vector.broadcast %11 : vector<1x32xf32> to vector<2x32xf32>
    %275 = arith.addf %273, %274 : vector<2x32xf32>
    %276 = arith.negf %275 : vector<2x32xf32>
    %277 = math.exp %276 : vector<2x32xf32>
    %cst_63 = arith.constant 1.000000e+00 : f32
    %278 = vector.broadcast %cst_63 : f32 to vector<2x32xf32>
    %279 = arith.addf %278, %277 : vector<2x32xf32>
    %280 = arith.divf %278, %279 : vector<2x32xf32>
    %281 = vector.extract_strided_slice %259 {offsets = [0, 64], sizes = [2, 32], strides = [1, 1]} : vector<2x96xf32> to vector<2x32xf32>
    %282 = vector.broadcast %12 : vector<1x32xf32> to vector<2x32xf32>
    %283 = arith.addf %281, %282 : vector<2x32xf32>
    %284 = vector.extract_strided_slice %260 {offsets = [0, 64], sizes = [2, 32], strides = [1, 1]} : vector<2x96xf32> to vector<2x32xf32>
    %285 = vector.broadcast %13 : vector<1x32xf32> to vector<2x32xf32>
    %286 = arith.addf %284, %285 : vector<2x32xf32>
    %287 = arith.mulf %270, %286 : vector<2x32xf32>
    %288 = arith.addf %283, %287 : vector<2x32xf32>
    %289 = math.tanh %288 : vector<2x32xf32>
    %cst_64 = arith.constant 1.000000e+00 : f32
    %290 = vector.broadcast %cst_64 : f32 to vector<2x32xf32>
    %291 = arith.subf %290, %280 : vector<2x32xf32>
    %292 = arith.mulf %291, %289 : vector<2x32xf32>
    %293 = arith.mulf %280, %226 : vector<2x32xf32>
    %294 = arith.addf %292, %293 : vector<2x32xf32>
    %c4_i32 = arith.constant 4 : i32
    %c2_i32_65 = arith.constant 2 : i32
    %295 = arith.muli %c4_i32, %c2_i32_65 : i32
    %296 = arith.index_cast %295 : i32 to index
    %c0_66 = arith.constant 0 : index
    %297 = vector.load %arg12[%296, %c0_66] : memref<16x96xf32, #tpu.memory_space<vmem>>, vector<2x96xf32>
    %cst_67 = arith.constant dense<0.000000e+00> : vector<2x96xf32>
    %298 = tpu.matmul %258, %0, %cst_67 {dimension_numbers = #tpu.dot_dimension_numbers<[1], [0], [0], [1], [0, 0, 1, 1], [], []>} : vector<2x32xf32>, vector<32x96xf32>, vector<2x96xf32> -> vector<2x96xf32>
    %299 = vector.broadcast %3 : vector<1x96xf32> to vector<2x96xf32>
    %300 = arith.addf %298, %299 : vector<2x96xf32>
    %301 = vector.extract_strided_slice %297 {offsets = [0, 0], sizes = [2, 32], strides = [1, 1]} : vector<2x96xf32> to vector<2x32xf32>
    %302 = vector.extract_strided_slice %300 {offsets = [0, 0], sizes = [2, 32], strides = [1, 1]} : vector<2x96xf32> to vector<2x32xf32>
    %303 = arith.addf %301, %302 : vector<2x32xf32>
    %304 = arith.negf %303 : vector<2x32xf32>
    %305 = math.exp %304 : vector<2x32xf32>
    %cst_68 = arith.constant 1.000000e+00 : f32
    %306 = vector.broadcast %cst_68 : f32 to vector<2x32xf32>
    %307 = arith.addf %306, %305 : vector<2x32xf32>
    %308 = arith.divf %306, %307 : vector<2x32xf32>
    %309 = vector.extract_strided_slice %297 {offsets = [0, 32], sizes = [2, 32], strides = [1, 1]} : vector<2x96xf32> to vector<2x32xf32>
    %310 = vector.extract_strided_slice %300 {offsets = [0, 32], sizes = [2, 32], strides = [1, 1]} : vector<2x96xf32> to vector<2x32xf32>
    %311 = arith.addf %309, %310 : vector<2x32xf32>
    %312 = arith.negf %311 : vector<2x32xf32>
    %313 = math.exp %312 : vector<2x32xf32>
    %cst_69 = arith.constant 1.000000e+00 : f32
    %314 = vector.broadcast %cst_69 : f32 to vector<2x32xf32>
    %315 = arith.addf %314, %313 : vector<2x32xf32>
    %316 = arith.divf %314, %315 : vector<2x32xf32>
    %317 = vector.extract_strided_slice %297 {offsets = [0, 64], sizes = [2, 32], strides = [1, 1]} : vector<2x96xf32> to vector<2x32xf32>
    %318 = vector.extract_strided_slice %300 {offsets = [0, 64], sizes = [2, 32], strides = [1, 1]} : vector<2x96xf32> to vector<2x32xf32>
    %319 = arith.mulf %308, %318 : vector<2x32xf32>
    %320 = arith.addf %317, %319 : vector<2x32xf32>
    %321 = math.tanh %320 : vector<2x32xf32>
    %cst_70 = arith.constant 1.000000e+00 : f32
    %322 = vector.broadcast %cst_70 : f32 to vector<2x32xf32>
    %323 = arith.subf %322, %316 : vector<2x32xf32>
    %324 = arith.mulf %323, %321 : vector<2x32xf32>
    %325 = arith.mulf %316, %258 : vector<2x32xf32>
    %326 = arith.addf %324, %325 : vector<2x32xf32>
    %cst_71 = arith.constant dense<0.000000e+00> : vector<2x96xf32>
    %327 = tpu.matmul %326, %1, %cst_71 {dimension_numbers = #tpu.dot_dimension_numbers<[1], [0], [0], [1], [0, 0, 1, 1], [], []>} : vector<2x32xf32>, vector<32x96xf32>, vector<2x96xf32> -> vector<2x96xf32>
    %cst_72 = arith.constant dense<0.000000e+00> : vector<2x96xf32>
    %328 = tpu.matmul %294, %2, %cst_72 {dimension_numbers = #tpu.dot_dimension_numbers<[1], [0], [0], [1], [0, 0, 1, 1], [], []>} : vector<2x32xf32>, vector<32x96xf32>, vector<2x96xf32> -> vector<2x96xf32>
    %329 = vector.extract_strided_slice %327 {offsets = [0, 0], sizes = [2, 32], strides = [1, 1]} : vector<2x96xf32> to vector<2x32xf32>
    %330 = vector.extract_strided_slice %328 {offsets = [0, 0], sizes = [2, 32], strides = [1, 1]} : vector<2x96xf32> to vector<2x32xf32>
    %331 = arith.addf %329, %330 : vector<2x32xf32>
    %332 = vector.broadcast %8 : vector<1x32xf32> to vector<2x32xf32>
    %333 = arith.addf %331, %332 : vector<2x32xf32>
    %334 = arith.negf %333 : vector<2x32xf32>
    %335 = math.exp %334 : vector<2x32xf32>
    %cst_73 = arith.constant 1.000000e+00 : f32
    %336 = vector.broadcast %cst_73 : f32 to vector<2x32xf32>
    %337 = arith.addf %336, %335 : vector<2x32xf32>
    %338 = arith.divf %336, %337 : vector<2x32xf32>
    %339 = vector.extract_strided_slice %327 {offsets = [0, 32], sizes = [2, 32], strides = [1, 1]} : vector<2x96xf32> to vector<2x32xf32>
    %340 = vector.extract_strided_slice %328 {offsets = [0, 32], sizes = [2, 32], strides = [1, 1]} : vector<2x96xf32> to vector<2x32xf32>
    %341 = arith.addf %339, %340 : vector<2x32xf32>
    %342 = vector.broadcast %11 : vector<1x32xf32> to vector<2x32xf32>
    %343 = arith.addf %341, %342 : vector<2x32xf32>
    %344 = arith.negf %343 : vector<2x32xf32>
    %345 = math.exp %344 : vector<2x32xf32>
    %cst_74 = arith.constant 1.000000e+00 : f32
    %346 = vector.broadcast %cst_74 : f32 to vector<2x32xf32>
    %347 = arith.addf %346, %345 : vector<2x32xf32>
    %348 = arith.divf %346, %347 : vector<2x32xf32>
    %349 = vector.extract_strided_slice %327 {offsets = [0, 64], sizes = [2, 32], strides = [1, 1]} : vector<2x96xf32> to vector<2x32xf32>
    %350 = vector.broadcast %12 : vector<1x32xf32> to vector<2x32xf32>
    %351 = arith.addf %349, %350 : vector<2x32xf32>
    %352 = vector.extract_strided_slice %328 {offsets = [0, 64], sizes = [2, 32], strides = [1, 1]} : vector<2x96xf32> to vector<2x32xf32>
    %353 = vector.broadcast %13 : vector<1x32xf32> to vector<2x32xf32>
    %354 = arith.addf %352, %353 : vector<2x32xf32>
    %355 = arith.mulf %338, %354 : vector<2x32xf32>
    %356 = arith.addf %351, %355 : vector<2x32xf32>
    %357 = math.tanh %356 : vector<2x32xf32>
    %cst_75 = arith.constant 1.000000e+00 : f32
    %358 = vector.broadcast %cst_75 : f32 to vector<2x32xf32>
    %359 = arith.subf %358, %348 : vector<2x32xf32>
    %360 = arith.mulf %359, %357 : vector<2x32xf32>
    %361 = arith.mulf %348, %294 : vector<2x32xf32>
    %362 = arith.addf %360, %361 : vector<2x32xf32>
    %c5_i32 = arith.constant 5 : i32
    %c2_i32_76 = arith.constant 2 : i32
    %363 = arith.muli %c5_i32, %c2_i32_76 : i32
    %364 = arith.index_cast %363 : i32 to index
    %c0_77 = arith.constant 0 : index
    %365 = vector.load %arg12[%364, %c0_77] : memref<16x96xf32, #tpu.memory_space<vmem>>, vector<2x96xf32>
    %cst_78 = arith.constant dense<0.000000e+00> : vector<2x96xf32>
    %366 = tpu.matmul %326, %0, %cst_78 {dimension_numbers = #tpu.dot_dimension_numbers<[1], [0], [0], [1], [0, 0, 1, 1], [], []>} : vector<2x32xf32>, vector<32x96xf32>, vector<2x96xf32> -> vector<2x96xf32>
    %367 = vector.broadcast %3 : vector<1x96xf32> to vector<2x96xf32>
    %368 = arith.addf %366, %367 : vector<2x96xf32>
    %369 = vector.extract_strided_slice %365 {offsets = [0, 0], sizes = [2, 32], strides = [1, 1]} : vector<2x96xf32> to vector<2x32xf32>
    %370 = vector.extract_strided_slice %368 {offsets = [0, 0], sizes = [2, 32], strides = [1, 1]} : vector<2x96xf32> to vector<2x32xf32>
    %371 = arith.addf %369, %370 : vector<2x32xf32>
    %372 = arith.negf %371 : vector<2x32xf32>
    %373 = math.exp %372 : vector<2x32xf32>
    %cst_79 = arith.constant 1.000000e+00 : f32
    %374 = vector.broadcast %cst_79 : f32 to vector<2x32xf32>
    %375 = arith.addf %374, %373 : vector<2x32xf32>
    %376 = arith.divf %374, %375 : vector<2x32xf32>
    %377 = vector.extract_strided_slice %365 {offsets = [0, 32], sizes = [2, 32], strides = [1, 1]} : vector<2x96xf32> to vector<2x32xf32>
    %378 = vector.extract_strided_slice %368 {offsets = [0, 32], sizes = [2, 32], strides = [1, 1]} : vector<2x96xf32> to vector<2x32xf32>
    %379 = arith.addf %377, %378 : vector<2x32xf32>
    %380 = arith.negf %379 : vector<2x32xf32>
    %381 = math.exp %380 : vector<2x32xf32>
    %cst_80 = arith.constant 1.000000e+00 : f32
    %382 = vector.broadcast %cst_80 : f32 to vector<2x32xf32>
    %383 = arith.addf %382, %381 : vector<2x32xf32>
    %384 = arith.divf %382, %383 : vector<2x32xf32>
    %385 = vector.extract_strided_slice %365 {offsets = [0, 64], sizes = [2, 32], strides = [1, 1]} : vector<2x96xf32> to vector<2x32xf32>
    %386 = vector.extract_strided_slice %368 {offsets = [0, 64], sizes = [2, 32], strides = [1, 1]} : vector<2x96xf32> to vector<2x32xf32>
    %387 = arith.mulf %376, %386 : vector<2x32xf32>
    %388 = arith.addf %385, %387 : vector<2x32xf32>
    %389 = math.tanh %388 : vector<2x32xf32>
    %cst_81 = arith.constant 1.000000e+00 : f32
    %390 = vector.broadcast %cst_81 : f32 to vector<2x32xf32>
    %391 = arith.subf %390, %384 : vector<2x32xf32>
    %392 = arith.mulf %391, %389 : vector<2x32xf32>
    %393 = arith.mulf %384, %326 : vector<2x32xf32>
    %394 = arith.addf %392, %393 : vector<2x32xf32>
    %cst_82 = arith.constant dense<0.000000e+00> : vector<2x96xf32>
    %395 = tpu.matmul %394, %1, %cst_82 {dimension_numbers = #tpu.dot_dimension_numbers<[1], [0], [0], [1], [0, 0, 1, 1], [], []>} : vector<2x32xf32>, vector<32x96xf32>, vector<2x96xf32> -> vector<2x96xf32>
    %cst_83 = arith.constant dense<0.000000e+00> : vector<2x96xf32>
    %396 = tpu.matmul %362, %2, %cst_83 {dimension_numbers = #tpu.dot_dimension_numbers<[1], [0], [0], [1], [0, 0, 1, 1], [], []>} : vector<2x32xf32>, vector<32x96xf32>, vector<2x96xf32> -> vector<2x96xf32>
    %397 = vector.extract_strided_slice %395 {offsets = [0, 0], sizes = [2, 32], strides = [1, 1]} : vector<2x96xf32> to vector<2x32xf32>
    %398 = vector.extract_strided_slice %396 {offsets = [0, 0], sizes = [2, 32], strides = [1, 1]} : vector<2x96xf32> to vector<2x32xf32>
    %399 = arith.addf %397, %398 : vector<2x32xf32>
    %400 = vector.broadcast %8 : vector<1x32xf32> to vector<2x32xf32>
    %401 = arith.addf %399, %400 : vector<2x32xf32>
    %402 = arith.negf %401 : vector<2x32xf32>
    %403 = math.exp %402 : vector<2x32xf32>
    %cst_84 = arith.constant 1.000000e+00 : f32
    %404 = vector.broadcast %cst_84 : f32 to vector<2x32xf32>
    %405 = arith.addf %404, %403 : vector<2x32xf32>
    %406 = arith.divf %404, %405 : vector<2x32xf32>
    %407 = vector.extract_strided_slice %395 {offsets = [0, 32], sizes = [2, 32], strides = [1, 1]} : vector<2x96xf32> to vector<2x32xf32>
    %408 = vector.extract_strided_slice %396 {offsets = [0, 32], sizes = [2, 32], strides = [1, 1]} : vector<2x96xf32> to vector<2x32xf32>
    %409 = arith.addf %407, %408 : vector<2x32xf32>
    %410 = vector.broadcast %11 : vector<1x32xf32> to vector<2x32xf32>
    %411 = arith.addf %409, %410 : vector<2x32xf32>
    %412 = arith.negf %411 : vector<2x32xf32>
    %413 = math.exp %412 : vector<2x32xf32>
    %cst_85 = arith.constant 1.000000e+00 : f32
    %414 = vector.broadcast %cst_85 : f32 to vector<2x32xf32>
    %415 = arith.addf %414, %413 : vector<2x32xf32>
    %416 = arith.divf %414, %415 : vector<2x32xf32>
    %417 = vector.extract_strided_slice %395 {offsets = [0, 64], sizes = [2, 32], strides = [1, 1]} : vector<2x96xf32> to vector<2x32xf32>
    %418 = vector.broadcast %12 : vector<1x32xf32> to vector<2x32xf32>
    %419 = arith.addf %417, %418 : vector<2x32xf32>
    %420 = vector.extract_strided_slice %396 {offsets = [0, 64], sizes = [2, 32], strides = [1, 1]} : vector<2x96xf32> to vector<2x32xf32>
    %421 = vector.broadcast %13 : vector<1x32xf32> to vector<2x32xf32>
    %422 = arith.addf %420, %421 : vector<2x32xf32>
    %423 = arith.mulf %406, %422 : vector<2x32xf32>
    %424 = arith.addf %419, %423 : vector<2x32xf32>
    %425 = math.tanh %424 : vector<2x32xf32>
    %cst_86 = arith.constant 1.000000e+00 : f32
    %426 = vector.broadcast %cst_86 : f32 to vector<2x32xf32>
    %427 = arith.subf %426, %416 : vector<2x32xf32>
    %428 = arith.mulf %427, %425 : vector<2x32xf32>
    %429 = arith.mulf %416, %362 : vector<2x32xf32>
    %430 = arith.addf %428, %429 : vector<2x32xf32>
    %c6_i32 = arith.constant 6 : i32
    %c2_i32_87 = arith.constant 2 : i32
    %431 = arith.muli %c6_i32, %c2_i32_87 : i32
    %432 = arith.index_cast %431 : i32 to index
    %c0_88 = arith.constant 0 : index
    %433 = vector.load %arg12[%432, %c0_88] : memref<16x96xf32, #tpu.memory_space<vmem>>, vector<2x96xf32>
    %cst_89 = arith.constant dense<0.000000e+00> : vector<2x96xf32>
    %434 = tpu.matmul %394, %0, %cst_89 {dimension_numbers = #tpu.dot_dimension_numbers<[1], [0], [0], [1], [0, 0, 1, 1], [], []>} : vector<2x32xf32>, vector<32x96xf32>, vector<2x96xf32> -> vector<2x96xf32>
    %435 = vector.broadcast %3 : vector<1x96xf32> to vector<2x96xf32>
    %436 = arith.addf %434, %435 : vector<2x96xf32>
    %437 = vector.extract_strided_slice %433 {offsets = [0, 0], sizes = [2, 32], strides = [1, 1]} : vector<2x96xf32> to vector<2x32xf32>
    %438 = vector.extract_strided_slice %436 {offsets = [0, 0], sizes = [2, 32], strides = [1, 1]} : vector<2x96xf32> to vector<2x32xf32>
    %439 = arith.addf %437, %438 : vector<2x32xf32>
    %440 = arith.negf %439 : vector<2x32xf32>
    %441 = math.exp %440 : vector<2x32xf32>
    %cst_90 = arith.constant 1.000000e+00 : f32
    %442 = vector.broadcast %cst_90 : f32 to vector<2x32xf32>
    %443 = arith.addf %442, %441 : vector<2x32xf32>
    %444 = arith.divf %442, %443 : vector<2x32xf32>
    %445 = vector.extract_strided_slice %433 {offsets = [0, 32], sizes = [2, 32], strides = [1, 1]} : vector<2x96xf32> to vector<2x32xf32>
    %446 = vector.extract_strided_slice %436 {offsets = [0, 32], sizes = [2, 32], strides = [1, 1]} : vector<2x96xf32> to vector<2x32xf32>
    %447 = arith.addf %445, %446 : vector<2x32xf32>
    %448 = arith.negf %447 : vector<2x32xf32>
    %449 = math.exp %448 : vector<2x32xf32>
    %cst_91 = arith.constant 1.000000e+00 : f32
    %450 = vector.broadcast %cst_91 : f32 to vector<2x32xf32>
    %451 = arith.addf %450, %449 : vector<2x32xf32>
    %452 = arith.divf %450, %451 : vector<2x32xf32>
    %453 = vector.extract_strided_slice %433 {offsets = [0, 64], sizes = [2, 32], strides = [1, 1]} : vector<2x96xf32> to vector<2x32xf32>
    %454 = vector.extract_strided_slice %436 {offsets = [0, 64], sizes = [2, 32], strides = [1, 1]} : vector<2x96xf32> to vector<2x32xf32>
    %455 = arith.mulf %444, %454 : vector<2x32xf32>
    %456 = arith.addf %453, %455 : vector<2x32xf32>
    %457 = math.tanh %456 : vector<2x32xf32>
    %cst_92 = arith.constant 1.000000e+00 : f32
    %458 = vector.broadcast %cst_92 : f32 to vector<2x32xf32>
    %459 = arith.subf %458, %452 : vector<2x32xf32>
    %460 = arith.mulf %459, %457 : vector<2x32xf32>
    %461 = arith.mulf %452, %394 : vector<2x32xf32>
    %462 = arith.addf %460, %461 : vector<2x32xf32>
    %cst_93 = arith.constant dense<0.000000e+00> : vector<2x96xf32>
    %463 = tpu.matmul %462, %1, %cst_93 {dimension_numbers = #tpu.dot_dimension_numbers<[1], [0], [0], [1], [0, 0, 1, 1], [], []>} : vector<2x32xf32>, vector<32x96xf32>, vector<2x96xf32> -> vector<2x96xf32>
    %cst_94 = arith.constant dense<0.000000e+00> : vector<2x96xf32>
    %464 = tpu.matmul %430, %2, %cst_94 {dimension_numbers = #tpu.dot_dimension_numbers<[1], [0], [0], [1], [0, 0, 1, 1], [], []>} : vector<2x32xf32>, vector<32x96xf32>, vector<2x96xf32> -> vector<2x96xf32>
    %465 = vector.extract_strided_slice %463 {offsets = [0, 0], sizes = [2, 32], strides = [1, 1]} : vector<2x96xf32> to vector<2x32xf32>
    %466 = vector.extract_strided_slice %464 {offsets = [0, 0], sizes = [2, 32], strides = [1, 1]} : vector<2x96xf32> to vector<2x32xf32>
    %467 = arith.addf %465, %466 : vector<2x32xf32>
    %468 = vector.broadcast %8 : vector<1x32xf32> to vector<2x32xf32>
    %469 = arith.addf %467, %468 : vector<2x32xf32>
    %470 = arith.negf %469 : vector<2x32xf32>
    %471 = math.exp %470 : vector<2x32xf32>
    %cst_95 = arith.constant 1.000000e+00 : f32
    %472 = vector.broadcast %cst_95 : f32 to vector<2x32xf32>
    %473 = arith.addf %472, %471 : vector<2x32xf32>
    %474 = arith.divf %472, %473 : vector<2x32xf32>
    %475 = vector.extract_strided_slice %463 {offsets = [0, 32], sizes = [2, 32], strides = [1, 1]} : vector<2x96xf32> to vector<2x32xf32>
    %476 = vector.extract_strided_slice %464 {offsets = [0, 32], sizes = [2, 32], strides = [1, 1]} : vector<2x96xf32> to vector<2x32xf32>
    %477 = arith.addf %475, %476 : vector<2x32xf32>
    %478 = vector.broadcast %11 : vector<1x32xf32> to vector<2x32xf32>
    %479 = arith.addf %477, %478 : vector<2x32xf32>
    %480 = arith.negf %479 : vector<2x32xf32>
    %481 = math.exp %480 : vector<2x32xf32>
    %cst_96 = arith.constant 1.000000e+00 : f32
    %482 = vector.broadcast %cst_96 : f32 to vector<2x32xf32>
    %483 = arith.addf %482, %481 : vector<2x32xf32>
    %484 = arith.divf %482, %483 : vector<2x32xf32>
    %485 = vector.extract_strided_slice %463 {offsets = [0, 64], sizes = [2, 32], strides = [1, 1]} : vector<2x96xf32> to vector<2x32xf32>
    %486 = vector.broadcast %12 : vector<1x32xf32> to vector<2x32xf32>
    %487 = arith.addf %485, %486 : vector<2x32xf32>
    %488 = vector.extract_strided_slice %464 {offsets = [0, 64], sizes = [2, 32], strides = [1, 1]} : vector<2x96xf32> to vector<2x32xf32>
    %489 = vector.broadcast %13 : vector<1x32xf32> to vector<2x32xf32>
    %490 = arith.addf %488, %489 : vector<2x32xf32>
    %491 = arith.mulf %474, %490 : vector<2x32xf32>
    %492 = arith.addf %487, %491 : vector<2x32xf32>
    %493 = math.tanh %492 : vector<2x32xf32>
    %cst_97 = arith.constant 1.000000e+00 : f32
    %494 = vector.broadcast %cst_97 : f32 to vector<2x32xf32>
    %495 = arith.subf %494, %484 : vector<2x32xf32>
    %496 = arith.mulf %495, %493 : vector<2x32xf32>
    %497 = arith.mulf %484, %430 : vector<2x32xf32>
    %498 = arith.addf %496, %497 : vector<2x32xf32>
    %c7_i32 = arith.constant 7 : i32
    %c2_i32_98 = arith.constant 2 : i32
    %499 = arith.muli %c7_i32, %c2_i32_98 : i32
    %500 = arith.index_cast %499 : i32 to index
    %c0_99 = arith.constant 0 : index
    %501 = vector.load %arg12[%500, %c0_99] : memref<16x96xf32, #tpu.memory_space<vmem>>, vector<2x96xf32>
    %cst_100 = arith.constant dense<0.000000e+00> : vector<2x96xf32>
    %502 = tpu.matmul %462, %0, %cst_100 {dimension_numbers = #tpu.dot_dimension_numbers<[1], [0], [0], [1], [0, 0, 1, 1], [], []>} : vector<2x32xf32>, vector<32x96xf32>, vector<2x96xf32> -> vector<2x96xf32>
    %503 = vector.broadcast %3 : vector<1x96xf32> to vector<2x96xf32>
    %504 = arith.addf %502, %503 : vector<2x96xf32>
    %505 = vector.extract_strided_slice %501 {offsets = [0, 0], sizes = [2, 32], strides = [1, 1]} : vector<2x96xf32> to vector<2x32xf32>
    %506 = vector.extract_strided_slice %504 {offsets = [0, 0], sizes = [2, 32], strides = [1, 1]} : vector<2x96xf32> to vector<2x32xf32>
    %507 = arith.addf %505, %506 : vector<2x32xf32>
    %508 = arith.negf %507 : vector<2x32xf32>
    %509 = math.exp %508 : vector<2x32xf32>
    %cst_101 = arith.constant 1.000000e+00 : f32
    %510 = vector.broadcast %cst_101 : f32 to vector<2x32xf32>
    %511 = arith.addf %510, %509 : vector<2x32xf32>
    %512 = arith.divf %510, %511 : vector<2x32xf32>
    %513 = vector.extract_strided_slice %501 {offsets = [0, 32], sizes = [2, 32], strides = [1, 1]} : vector<2x96xf32> to vector<2x32xf32>
    %514 = vector.extract_strided_slice %504 {offsets = [0, 32], sizes = [2, 32], strides = [1, 1]} : vector<2x96xf32> to vector<2x32xf32>
    %515 = arith.addf %513, %514 : vector<2x32xf32>
    %516 = arith.negf %515 : vector<2x32xf32>
    %517 = math.exp %516 : vector<2x32xf32>
    %cst_102 = arith.constant 1.000000e+00 : f32
    %518 = vector.broadcast %cst_102 : f32 to vector<2x32xf32>
    %519 = arith.addf %518, %517 : vector<2x32xf32>
    %520 = arith.divf %518, %519 : vector<2x32xf32>
    %521 = vector.extract_strided_slice %501 {offsets = [0, 64], sizes = [2, 32], strides = [1, 1]} : vector<2x96xf32> to vector<2x32xf32>
    %522 = vector.extract_strided_slice %504 {offsets = [0, 64], sizes = [2, 32], strides = [1, 1]} : vector<2x96xf32> to vector<2x32xf32>
    %523 = arith.mulf %512, %522 : vector<2x32xf32>
    %524 = arith.addf %521, %523 : vector<2x32xf32>
    %525 = math.tanh %524 : vector<2x32xf32>
    %cst_103 = arith.constant 1.000000e+00 : f32
    %526 = vector.broadcast %cst_103 : f32 to vector<2x32xf32>
    %527 = arith.subf %526, %520 : vector<2x32xf32>
    %528 = arith.mulf %527, %525 : vector<2x32xf32>
    %529 = arith.mulf %520, %462 : vector<2x32xf32>
    %530 = arith.addf %528, %529 : vector<2x32xf32>
    %cst_104 = arith.constant dense<0.000000e+00> : vector<2x96xf32>
    %531 = tpu.matmul %530, %1, %cst_104 {dimension_numbers = #tpu.dot_dimension_numbers<[1], [0], [0], [1], [0, 0, 1, 1], [], []>} : vector<2x32xf32>, vector<32x96xf32>, vector<2x96xf32> -> vector<2x96xf32>
    %cst_105 = arith.constant dense<0.000000e+00> : vector<2x96xf32>
    %532 = tpu.matmul %498, %2, %cst_105 {dimension_numbers = #tpu.dot_dimension_numbers<[1], [0], [0], [1], [0, 0, 1, 1], [], []>} : vector<2x32xf32>, vector<32x96xf32>, vector<2x96xf32> -> vector<2x96xf32>
    %533 = vector.extract_strided_slice %531 {offsets = [0, 0], sizes = [2, 32], strides = [1, 1]} : vector<2x96xf32> to vector<2x32xf32>
    %534 = vector.extract_strided_slice %532 {offsets = [0, 0], sizes = [2, 32], strides = [1, 1]} : vector<2x96xf32> to vector<2x32xf32>
    %535 = arith.addf %533, %534 : vector<2x32xf32>
    %536 = vector.broadcast %8 : vector<1x32xf32> to vector<2x32xf32>
    %537 = arith.addf %535, %536 : vector<2x32xf32>
    %538 = arith.negf %537 : vector<2x32xf32>
    %539 = math.exp %538 : vector<2x32xf32>
    %cst_106 = arith.constant 1.000000e+00 : f32
    %540 = vector.broadcast %cst_106 : f32 to vector<2x32xf32>
    %541 = arith.addf %540, %539 : vector<2x32xf32>
    %542 = arith.divf %540, %541 : vector<2x32xf32>
    %543 = vector.extract_strided_slice %531 {offsets = [0, 32], sizes = [2, 32], strides = [1, 1]} : vector<2x96xf32> to vector<2x32xf32>
    %544 = vector.extract_strided_slice %532 {offsets = [0, 32], sizes = [2, 32], strides = [1, 1]} : vector<2x96xf32> to vector<2x32xf32>
    %545 = arith.addf %543, %544 : vector<2x32xf32>
    %546 = vector.broadcast %11 : vector<1x32xf32> to vector<2x32xf32>
    %547 = arith.addf %545, %546 : vector<2x32xf32>
    %548 = arith.negf %547 : vector<2x32xf32>
    %549 = math.exp %548 : vector<2x32xf32>
    %cst_107 = arith.constant 1.000000e+00 : f32
    %550 = vector.broadcast %cst_107 : f32 to vector<2x32xf32>
    %551 = arith.addf %550, %549 : vector<2x32xf32>
    %552 = arith.divf %550, %551 : vector<2x32xf32>
    %553 = vector.extract_strided_slice %531 {offsets = [0, 64], sizes = [2, 32], strides = [1, 1]} : vector<2x96xf32> to vector<2x32xf32>
    %554 = vector.broadcast %12 : vector<1x32xf32> to vector<2x32xf32>
    %555 = arith.addf %553, %554 : vector<2x32xf32>
    %556 = vector.extract_strided_slice %532 {offsets = [0, 64], sizes = [2, 32], strides = [1, 1]} : vector<2x96xf32> to vector<2x32xf32>
    %557 = vector.broadcast %13 : vector<1x32xf32> to vector<2x32xf32>
    %558 = arith.addf %556, %557 : vector<2x32xf32>
    %559 = arith.mulf %542, %558 : vector<2x32xf32>
    %560 = arith.addf %555, %559 : vector<2x32xf32>
    %561 = math.tanh %560 : vector<2x32xf32>
    %cst_108 = arith.constant 1.000000e+00 : f32
    %562 = vector.broadcast %cst_108 : f32 to vector<2x32xf32>
    %563 = arith.subf %562, %552 : vector<2x32xf32>
    %564 = arith.mulf %563, %561 : vector<2x32xf32>
    %565 = arith.mulf %552, %498 : vector<2x32xf32>
    %566 = arith.addf %564, %565 : vector<2x32xf32>
    %c8_i32 = arith.constant 8 : i32
    %c0_109 = arith.constant 0 : index
    %c0_110 = arith.constant 0 : index
    %567 = vector.load %arg9[%c0_109, %c0_110] : memref<32x16xf32, #tpu.memory_space<vmem>>, vector<32x16xf32>
    %cst_111 = arith.constant dense<0.000000e+00> : vector<2x16xf32>
    %568 = tpu.matmul %566, %567, %cst_111 {dimension_numbers = #tpu.dot_dimension_numbers<[1], [0], [0], [1], [0, 0, 1, 1], [], []>} : vector<2x32xf32>, vector<32x16xf32>, vector<2x16xf32> -> vector<2x16xf32>
    %c0_112 = arith.constant 0 : index
    %c0_113 = arith.constant 0 : index
    %569 = vector.load %arg10[%c0_112, %c0_113] : memref<1x16xf32, #tpu.memory_space<vmem>>, vector<1x16xf32>
    %570 = vector.broadcast %569 : vector<1x16xf32> to vector<2x16xf32>
    %571 = arith.addf %568, %570 : vector<2x16xf32>
    %c0_114 = arith.constant 0 : index
    %c0_115 = arith.constant 0 : index
    %572 = vector.load %arg11[%c0_114, %c0_115] : memref<2x16xf32, #tpu.memory_space<vmem>>, vector<2x16xf32>
    tpu.vector_store %arg11[%c0_114, %c0_115], %571 {strides = array<i32>} : memref<2x16xf32, #tpu.memory_space<vmem>>, vector<2x16xf32>,
    return
  }
}

</mosaic_0001>

<llo_original>
// kernel: random_number_gru_forward.1
$region0: #{random_number_gru_forward.1}
  #allocation0 [shape = 'u32[]', space=smem, size = 0x4, offset = 0x4, fixed_abs, tag = 'smem constant byte address 0x4 - core index']
  #allocation1 [shape = 'u32[72,128]{1,0:T(1,128)}', space=vmem, size = 0x9000, scoped, tag = 'internal scratch']
  #allocation2 [shape = 'f32[16,96]{1,0:T(8,128)}', space=vmem, size = 0x2000, scoped, tag = 'scratch operand']
  %s0 = inlined_call_operand.vmem [shape: f32[16,8], index: 0, kind: input, shape index: {}]
  %s1 = inlined_call_operand.vmem [shape: f32[8,96], index: 1, kind: input, shape index: {}]
  %s2 = inlined_call_operand.vmem [shape: f32[32,96], index: 2, kind: input, shape index: {}]
  %s3 = inlined_call_operand.hbm [shape: f32[1,96], index: 3, kind: input, shape index: {}]
  %s4 = inlined_call_operand.hbm [shape: f32[1,96], index: 4, kind: input, shape index: {}]
  %s5 = inlined_call_operand.vmem [shape: f32[32,96], index: 5, kind: input, shape index: {}]
  %s6 = inlined_call_operand.hbm [shape: f32[32,96], index: 6, kind: input, shape index: {}]
  %s7 = inlined_call_operand.hbm [shape: f32[1,96], index: 7, kind: input, shape index: {}]
  %s8 = inlined_call_operand.hbm [shape: f32[1,96], index: 8, kind: input, shape index: {}]
  %s9 = inlined_call_operand.vmem [shape: f32[32,16], index: 9, kind: input, shape index: {}]
  %s10 = inlined_call_operand.hbm [shape: f32[1,16], index: 10, kind: input, shape index: {}]
  %s11 = inlined_call_operand.hbm [shape: f32[2,16], index: 11, kind: output, shape index: {}]
  %s12 = sld [smem:[#allocation0]]
  $region78: #{random_number_gru_forward.1} parent=0
    _
  %s14 = ssub.s32 1, %s12
  %s15 = scalar_select 0, %s14, %s12
  $region1: #{random_number_gru_forward.1} parent=0
    #allocation3 [shape = 'u8[512]{0}', space=vmem, size = 0x400, scoped, tag = 'input window, operand 3, single buffered']
    #allocation4 [shape = 's32[1]{0}', space=sflag, size = 0x4, scoped, tag = 'scoped memory for random_number_gru_forward.1']
    #allocation5 [shape = 's32[1]{0}', space=sflag, size = 0x4, scoped, tag = 'scoped memory for random_number_gru_forward.1']
    #allocation6 [shape = 'u8[512]{0}', space=vmem, size = 0x400, scoped, tag = 'input window, operand 4, single buffered']
    #allocation7 [shape = 's32[1]{0}', space=sflag, size = 0x4, scoped, tag = 'scoped memory for random_number_gru_forward.1']
    #allocation8 [shape = 'u8[16384]{0}', space=vmem, size = 0x4000, scoped, tag = 'input window, operand 6, single buffered']
    #allocation9 [shape = 'u8[512]{0}', space=vmem, size = 0x400, scoped, tag = 'input window, operand 7, single buffered']
    #allocation10 [shape = 's32[1]{0}', space=sflag, size = 0x4, scoped, tag = 'scoped memory for random_number_gru_forward.1']
    #allocation11 [shape = 'u8[512]{0}', space=vmem, size = 0x400, scoped, tag = 'input window, operand 8, single buffered']
    #allocation12 [shape = 'u8[512]{0}', space=vmem, size = 0x400, scoped, tag = 'input window, operand 10, single buffered']
    #allocation13 [shape = 's32[1]{0}', space=sflag, size = 0x4, scoped, tag = 'scoped memory for random_number_gru_forward.1']
    #allocation14 [shape = 'u8[1024]{0}', space=vmem, size = 0x400, scoped, tag = 'output window, operand 0, single buffered']
    %16 = vsyncpa [#allocation4], 0
    %17 = vsyncpa [#allocation7], 0
    %18 = vsyncpa [#allocation10], 0
    %19 = vsyncpa [#allocation13], 0
    %20 = vsyncpa [#allocation5], 0
    // Predicated region
    $region2: #{random_number_gru_forward.1} parent=1 // pred_check
      _
    $region3: #{random_number_gru_forward.1} parent=1 // pred_check_branch
      %22 = sbr.rel (0) target = $region5
    $region4: #{random_number_gru_forward.1} parent=1 // pred_region
      _
    $region5: #{random_number_gru_forward.1} parent=1 // pred_fallthru
      _
    // Predicated region
    $region6: #{random_number_gru_forward.1} parent=1 // pred_check
      _
    $region7: #{random_number_gru_forward.1} parent=1 // pred_check_branch
      %24 = sbr.rel (0) target = $region9
    $region8: #{random_number_gru_forward.1} parent=1 // pred_region
      _
    $region9: #{random_number_gru_forward.1} parent=1 // pred_fallthru
      _
    // Predicated region
    $region10: #{random_number_gru_forward.1} parent=1 // pred_check
      _
    $region11: #{random_number_gru_forward.1} parent=1 // pred_check_branch
      %26 = sbr.rel (0) target = $region13
    $region12: #{random_number_gru_forward.1} parent=1 // pred_region
      _
    $region13: #{random_number_gru_forward.1} parent=1 // pred_fallthru
      _
    // Predicated region
    $region14: #{random_number_gru_forward.1} parent=1 // pred_check
      _
    $region15: #{random_number_gru_forward.1} parent=1 // pred_check_branch
      %28 = sbr.rel (0) target = $region17
    $region16: #{random_number_gru_forward.1} parent=1 // pred_region
      %30 = vsyncadd [#allocation4], 0
      %s32 = sshll.u32 %s3, 4
      %s33 = int_to_ptr.hbm [resolvable:$true] %s32
      %s34 = sshll.u32 [#allocation3], 4
      %s35 = int_to_ptr.vmem [resolvable:$true] %s34
      %37 = dma.hbm_to_vmem [thread:$0]  %s33, 16, %s35, [#allocation4]
    $region17: #{random_number_gru_forward.1} parent=1 // pred_fallthru
      _
    // Predicated region
    $region18: #{random_number_gru_forward.1} parent=1 // pred_check
      _
    $region19: #{random_number_gru_forward.1} parent=1 // pred_check_branch
      %39 = sbr.rel (0) target = $region21
    $region20: #{random_number_gru_forward.1} parent=1 // pred_region
      %41 = vsyncadd [#allocation7], 0
      %s43 = sshll.u32 %s4, 4
      %s44 = int_to_ptr.hbm [resolvable:$true] %s43
      %s45 = sshll.u32 [#allocation6], 4
      %s46 = int_to_ptr.vmem [resolvable:$true] %s45
      %48 = dma.hbm_to_vmem [thread:$0]  %s44, 16, %s46, [#allocation7]
    $region21: #{random_number_gru_forward.1} parent=1 // pred_fallthru
      _
    // Predicated region
    $region22: #{random_number_gru_forward.1} parent=1 // pred_check
      _
    $region23: #{random_number_gru_forward.1} parent=1 // pred_check_branch
      %50 = sbr.rel (0) target = $region25
    $region24: #{random_number_gru_forward.1} parent=1 // pred_region
      _
    $region25: #{random_number_gru_forward.1} parent=1 // pred_fallthru
      _
    // Predicated region
    $region26: #{random_number_gru_forward.1} parent=1 // pred_check
      _
    $region27: #{random_number_gru_forward.1} parent=1 // pred_check_branch
      %52 = sbr.rel (0) target = $region29
    $region28: #{random_number_gru_forward.1} parent=1 // pred_region
      %54 = vsyncadd [#allocation7], 0
      %s55 = sshll.u32 %s6, 4
      %s56 = int_to_ptr.hbm [resolvable:$true] %s55
      %s57 = sshll.u32 [#allocation8], 4
      %s58 = int_to_ptr.vmem [resolvable:$true] %s57
      %63 = dma.hbm_to_vmem [thread:$0]  %s56, 512, %s58, [#allocation7], 128, 128, 8
    $region29: #{random_number_gru_forward.1} parent=1 // pred_fallthru
      _
    // Predicated region
    $region30: #{random_number_gru_forward.1} parent=1 // pred_check
      _
    $region31: #{random_number_gru_forward.1} parent=1 // pred_check_branch
      %65 = sbr.rel (0) target = $region33
    $region32: #{random_number_gru_forward.1} parent=1 // pred_region
      %67 = vsyncadd [#allocation10], 0
      %s69 = sshll.u32 %s7, 4
      %s70 = int_to_ptr.hbm [resolvable:$true] %s69
      %s71 = sshll.u32 [#allocation9], 4
      %s72 = int_to_ptr.vmem [resolvable:$true] %s71
      %74 = dma.hbm_to_vmem [thread:$0]  %s70, 16, %s72, [#allocation10]
    $region33: #{random_number_gru_forward.1} parent=1 // pred_fallthru
      _
    // Predicated region
    $region34: #{random_number_gru_forward.1} parent=1 // pred_check
      _
    $region35: #{random_number_gru_forward.1} parent=1 // pred_check_branch
      %76 = sbr.rel (0) target = $region37
    $region36: #{random_number_gru_forward.1} parent=1 // pred_region
      %78 = vsyncadd [#allocation10], 0
      %s80 = sshll.u32 %s8, 4
      %s81 = int_to_ptr.hbm [resolvable:$true] %s80
      %s82 = sshll.u32 [#allocation11], 4
      %s83 = int_to_ptr.vmem [resolvable:$true] %s82
      %85 = dma.hbm_to_vmem [thread:$0]  %s81, 16, %s83, [#allocation10]
    $region37: #{random_number_gru_forward.1} parent=1 // pred_fallthru
      _
    // Predicated region
    $region38: #{random_number_gru_forward.1} parent=1 // pred_check
      _
    $region39: #{random_number_gru_forward.1} parent=1 // pred_check_branch
      %87 = sbr.rel (0) target = $region41
    $region40: #{random_number_gru_forward.1} parent=1 // pred_region
      _
    $region41: #{random_number_gru_forward.1} parent=1 // pred_fallthru
      _
    // Predicated region
    $region42: #{random_number_gru_forward.1} parent=1 // pred_check
      _
    $region43: #{random_number_gru_forward.1} parent=1 // pred_check_branch
      %89 = sbr.rel (0) target = $region45
    $region44: #{random_number_gru_forward.1} parent=1 // pred_region
      %91 = vsyncadd [#allocation13], 0
      %s93 = sshll.u32 %s10, 4
      %s94 = int_to_ptr.hbm [resolvable:$true] %s93
      %s95 = sshll.u32 [#allocation12], 4
      %s96 = int_to_ptr.vmem [resolvable:$true] %s95
      %98 = dma.hbm_to_vmem [thread:$0]  %s94, 16, %s96, [#allocation13]
    $region45: #{random_number_gru_forward.1} parent=1 // pred_fallthru
      _
    // Predicated region
    $region46: #{random_number_gru_forward.1} parent=1 // pred_check
      _
    $region47: #{random_number_gru_forward.1} parent=1 // pred_check_branch
      %100 = sbr.rel (0) target = $region49
    $region48: #{random_number_gru_forward.1} parent=1 // pred_region
      %102 = dma.done [#allocation4], 16
    $region49: #{random_number_gru_forward.1} parent=1 // pred_fallthru
      _
    // Predicated region
    $region50: #{random_number_gru_forward.1} parent=1 // pred_check
      _
    $region51: #{random_number_gru_forward.1} parent=1 // pred_check_branch
      %104 = sbr.rel (0) target = $region53
    $region52: #{random_number_gru_forward.1} parent=1 // pred_region
      %106 = dma.done [#allocation7], 16
    $region53: #{random_number_gru_forward.1} parent=1 // pred_fallthru
      _
    // Predicated region
    $region54: #{random_number_gru_forward.1} parent=1 // pred_check
      _
    $region55: #{random_number_gru_forward.1} parent=1 // pred_check_branch
      %108 = sbr.rel (0) target = $region57
    $region56: #{random_number_gru_forward.1} parent=1 // pred_region
      %110 = dma.done [#allocation7], 512
    $region57: #{random_number_gru_forward.1} parent=1 // pred_fallthru
      _
    // Predicated region
    $region58: #{random_number_gru_forward.1} parent=1 // pred_check
      _
    $region59: #{random_number_gru_forward.1} parent=1 // pred_check_branch
      %112 = sbr.rel (0) target = $region61
    $region60: #{random_number_gru_forward.1} parent=1 // pred_region
      %114 = dma.done [#allocation10], 16
    $region61: #{random_number_gru_forward.1} parent=1 // pred_fallthru
      _
    // Predicated region
    $region62: #{random_number_gru_forward.1} parent=1 // pred_check
      _
    $region63: #{random_number_gru_forward.1} parent=1 // pred_check_branch
      %116 = sbr.rel (0) target = $region65
    $region64: #{random_number_gru_forward.1} parent=1 // pred_region
      %118 = dma.done [#allocation10], 16
    $region65: #{random_number_gru_forward.1} parent=1 // pred_fallthru
      _
    // Predicated region
    $region66: #{random_number_gru_forward.1} parent=1 // pred_check
      _
    $region67: #{random_number_gru_forward.1} parent=1 // pred_check_branch
      %120 = sbr.rel (0) target = $region69
    $region68: #{random_number_gru_forward.1} parent=1 // pred_region
      %122 = dma.done [#allocation13], 16
    $region69: #{random_number_gru_forward.1} parent=1 // pred_fallthru
      _
    %v123 = vld [vmem:[%s2] sm:$0xff]
    %v124 = vld [vmem:[%s2 + $0x8] sm:$0xff]
    %v125 = vld [vmem:[%s2 + $0x10] sm:$0xff]
    %v126 = vld [vmem:[%s2 + $0x18] sm:$0xff]
    %v127 = vld [vmem:[%s5] sm:$0xff]
    %v128 = vld [vmem:[%s5 + $0x8] sm:$0xff]
    %v129 = vld [vmem:[%s5 + $0x10] sm:$0xff]
    %v130 = vld [vmem:[%s5 + $0x18] sm:$0xff]
    %v131 = vld [vmem:[#allocation8] sm:$0xff]
    %v132 = vld [vmem:[#allocation8 + $0x8] sm:$0xff]
    %v133 = vld [vmem:[#allocation8 + $0x10] sm:$0xff]
    %v134 = vld [vmem:[#allocation8 + $0x18] sm:$0xff]
    %v135 = vld [vmem:[#allocation6] sm:$0x1]
    %v136 = vld [vmem:[#allocation9] sm:$0x1]
    %v137 = vld [vmem:[#allocation11] sm:$0x1]
    %v138 = vadd.f32 %v136, %v137
    %v139 = vld [vmem:[%s0] sm:$0xff]
    %v140 = vld [vmem:[%s0 + $0x8] sm:$0xff]
    %v141 = vld [vmem:[%s1] sm:$0xff]
    %v142 = vld [vmem:[#allocation3] sm:$0x1]
    %v144 = vperm.slane %v142, 0
    %vm146 = vcmask 64512
    %v148 = vsel %vm146, %v139, 0
    %v151 = vsel %vm146, %v140, 0
    %153 = vmatpush.msra.mxu0 0.0
    %154 = vmatpush.msra.mxu0 0.0
    %155 = vmatpush.msra.mxu0 0.0
    %156 = vmatpush.msra.mxu0 0.0
    %157 = vmatpush.msra.mxu0 0.0
    %158 = vmatpush.msra.mxu0 0.0
    %159 = vmatpush.msra.mxu0 0.0
    %160 = vmatpush.msra.mxu0 0.0
    %161 = vmatpush.msra.mxu0 0.0
    %162 = vmatpush.msra.mxu0 0.0
    %163 = vmatpush.msra.mxu0 0.0
    %164 = vmatpush.msra.mxu0 0.0
    %165 = vmatpush.msra.mxu0 0.0
    %166 = vmatpush.msra.mxu0 0.0
    %167 = vmatpush.msra.mxu0 0.0
    %168 = vmatpush.msra.mxu0 %v141
    %169 = vmatmul.f32.gmra.mxu0 %v148
    %v170 = vpop.f32.mrf.mxu0
    %v171 = vadd.f32 %v144, %v170
    %172 = vmatmul.f32.gmra.mxu0 %v151
    %v173 = vpop.f32.mrf.mxu0
    %v174 = vadd.f32 %v144, %v173
    %175 = vdwg.mxu0
    %vm176 = vcmask 785408
    %177 = vst.msk [vmem:[#allocation2] sm:$0xff] %vm176, %v171
    %178 = vst.msk [vmem:[#allocation2 + $0x8] sm:$0xff] %vm176, %v174
    %v179 = vld [vmem:[#allocation2] sm:$0x3]
    %v181 = vperm.slane %v135, 0
    %vm183 = vcmask 261120
    %v185 = vsel %vm183, 0.0, 0
    %187 = vmatpush.msra.mxu0 0.0
    %188 = vmatpush.msra.mxu0 0.0
    %189 = vmatpush.msra.mxu0 0.0
    %190 = vmatpush.msra.mxu0 0.0
    %191 = vmatpush.msra.mxu0 0.0
    %192 = vmatpush.msra.mxu0 0.0
    %193 = vmatpush.msra.mxu0 0.0
    %194 = vmatpush.msra.mxu0 0.0
    %195 = vmatpush.msra.mxu0 0.0
    %196 = vmatpush.msra.mxu0 0.0
    %197 = vmatpush.msra.mxu0 0.0
    %198 = vmatpush.msra.mxu0 0.0
    %199 = vmatpush.msra.mxu0 %v126
    %200 = vmatpush.msra.mxu0 %v125
    %201 = vmatpush.msra.mxu0 %v124
    %202 = vmatpush.msra.mxu0 %v123
    %203 = vmatmul.f32.gmra.mxu0 %v185
    %v204 = vpop.f32.mrf.mxu0
    %v205 = vadd.f32 %v181, %v204
    %206 = vdwg.mxu0
    %v207 = vadd.f32 %v179, %v205
    %v208 = vxor.u32 %v207, 2147483648
    %v209 = vmul.f32 %v208, 1.442695
    %v210 = vpow.pop %v209
    %v211 = vadd.f32 %v210, 1.0
    %v212 = vrcp.pop %v211
    %v213 = vmul.f32 %v211, %v212
    %v214 = vsub.f32 1.0, %v213
    %v215 = vmul.f32 %v212, %v214
    %v216 = vadd.f32 %v212, %v215
    %vm217 = vweird.f32 %v211
    %vm218 = vweird.f32 %v212
    %vm219 = vmor %vm217, %vm218
    %v220 = vsel %vm219, %v212, %v216
    %v221 = vand.u32 2147483647, %v211
    %vm222 = vcmp.eq.f32.partialorder %v221, 8.507059e+37
    %v223 = vand.u32 %v211, 2147483648
    %v224 = vor.u32 1.1754944e-38, %v223
    %v225 = vsel %vm222, %v224, %v220
    %v226 = vmul.f32 1.0, %v225
    %228 = vrot.lane.b32.xlu0 %v205, 64
    %v229 = vpop.permute.xlu0 %228
    %v231 = vmul.f32 %v226, %v229
    %233 = vrot.lane.b32.xlu0 %v231, 64
    %v234 = vpop.permute.xlu0 %233
    %v236 = vadd.f32 %v179, %v234
    %v237 = vtanh.pop %v236
    %v238 = vsub.f32 1.0, %v226
    %240 = vrot.lane.b32.xlu0 %v237, 96
    %v241 = vpop.permute.xlu0 %240
    %v243 = vmul.f32 %v238, %v241
    %v244 = vmul.f32 %v226, 0.0
    %v245 = vadd.f32 %v243, %v244
    %247 = vrot.lane.b32.xlu0 %v245, 96
    %v248 = vpop.permute.xlu0 %247
    %v249 = vsel %vm183, %v248, 0
    %251 = vmatpush.msra.mxu0 0.0
    %252 = vmatpush.msra.mxu0 0.0
    %253 = vmatpush.msra.mxu0 0.0
    %254 = vmatpush.msra.mxu0 0.0
    %255 = vmatpush.msra.mxu0 0.0
    %256 = vmatpush.msra.mxu0 0.0
    %257 = vmatpush.msra.mxu0 0.0
    %258 = vmatpush.msra.mxu0 0.0
    %259 = vmatpush.msra.mxu0 0.0
    %260 = vmatpush.msra.mxu0 0.0
    %261 = vmatpush.msra.mxu0 0.0
    %262 = vmatpush.msra.mxu0 0.0
    %263 = vmatpush.msra.mxu0 %v130
    %264 = vmatpush.msra.mxu0 %v129
    %265 = vmatpush.msra.mxu0 %v128
    %266 = vmatpush.msra.mxu0 %v127
    %267 = vmatmul.f32.gmra.mxu0 %v249
    %v268 = vpop.f32.mrf.mxu0
    %v269 = vadd.f32 0.0, %v268
    %270 = vdwg.mxu0
    %271 = vmatpush.msra.mxu0 0.0
    %272 = vmatpush.msra.mxu0 0.0
    %273 = vmatpush.msra.mxu0 0.0
    %274 = vmatpush.msra.mxu0 0.0
    %275 = vmatpush.msra.mxu0 0.0
    %276 = vmatpush.msra.mxu0 0.0
    %277 = vmatpush.msra.mxu0 0.0
    %278 = vmatpush.msra.mxu0 0.0
    %279 = vmatpush.msra.mxu0 0.0
    %280 = vmatpush.msra.mxu0 0.0
    %281 = vmatpush.msra.mxu0 0.0
    %282 = vmatpush.msra.mxu0 0.0
    %283 = vmatpush.msra.mxu0 %v134
    %284 = vmatpush.msra.mxu0 %v133
    %285 = vmatpush.msra.mxu0 %v132
    %286 = vmatpush.msra.mxu0 %v131
    %287 = vmatmul.f32.gmra.mxu0 %v185
    %v288 = vpop.f32.mrf.mxu0
    %v289 = vadd.f32 0.0, %v288
    %290 = vdwg.mxu0
    %v291 = vadd.f32 %v269, %v289
    %v293 = vperm.slane %v138, 0
    %v295 = vadd.f32 %v291, %v293
    %v296 = vxor.u32 %v295, 2147483648
    %v297 = vmul.f32 %v296, 1.442695
    %v298 = vpow.pop %v297
    %v299 = vadd.f32 %v298, 1.0
    %v300 = vrcp.pop %v299
    %v301 = vmul.f32 %v299, %v300
    %v302 = vsub.f32 1.0, %v301
    %v303 = vmul.f32 %v300, %v302
    %v304 = vadd.f32 %v300, %v303
    %vm305 = vweird.f32 %v299
    %vm306 = vweird.f32 %v300
    %vm307 = vmor %vm305, %vm306
    %v308 = vsel %vm307, %v300, %v304
    %v309 = vand.u32 2147483647, %v299
    %vm310 = vcmp.eq.f32.partialorder %v309, 8.507059e+37
    %v311 = vand.u32 %v299, 2147483648
    %v312 = vor.u32 1.1754944e-38, %v311
    %v313 = vsel %vm310, %v312, %v308
    %v314 = vmul.f32 1.0, %v313
    %v316 = vperm.slane %v136, 0
    %v318 = vadd.f32 %v269, %v316
    %v320 = vperm.slane %v137, 0
    %v322 = vadd.f32 %v289, %v320
    %324 = vrot.lane.b32.xlu0 %v322, 64
    %v325 = vpop.permute.xlu0 %324
    %v327 = vmul.f32 %v314, %v325
    %329 = vrot.lane.b32.xlu0 %v327, 64
    %v330 = vpop.permute.xlu0 %329
    %v332 = vadd.f32 %v318, %v330
    %v333 = vtanh.pop %v332
    %v334 = vsub.f32 1.0, %v314
    %336 = vrot.lane.b32.xlu0 %v333, 96
    %v337 = vpop.permute.xlu0 %336
    %v339 = vmul.f32 %v334, %v337
    %v340 = vmul.f32 %v314, 0.0
    %v341 = vadd.f32 %v339, %v340
    %v342 = vld [vmem:[#allocation2 + $0x2] sm:$0x3]
    %343 = vmatpush.msra.mxu0 0.0
    %344 = vmatpush.msra.mxu0 0.0
    %345 = vmatpush.msra.mxu0 0.0
    %346 = vmatpush.msra.mxu0 0.0
    %347 = vmatpush.msra.mxu0 0.0
    %348 = vmatpush.msra.mxu0 0.0
    %349 = vmatpush.msra.mxu0 0.0
    %350 = vmatpush.msra.mxu0 0.0
    %351 = vmatpush.msra.mxu0 0.0
    %352 = vmatpush.msra.mxu0 0.0
    %353 = vmatpush.msra.mxu0 0.0
    %354 = vmatpush.msra.mxu0 0.0
    %355 = vmatpush.msra.mxu0 %v126
    %356 = vmatpush.msra.mxu0 %v125
    %357 = vmatpush.msra.mxu0 %v124
    %358 = vmatpush.msra.mxu0 %v123
    %359 = vmatmul.f32.gmra.mxu0 %v249
    %v360 = vpop.f32.mrf.mxu0
    %v361 = vadd.f32 %v181, %v360
    %362 = vdwg.mxu0
    %v363 = vadd.f32 %v342, %v361
    %v364 = vxor.u32 %v363, 2147483648
    %v365 = vmul.f32 %v364, 1.442695
    %v366 = vpow.pop %v365
    %v367 = vadd.f32 %v366, 1.0
    %v368 = vrcp.pop %v367
    %v369 = vmul.f32 %v367, %v368
    %v370 = vsub.f32 1.0, %v369
    %v371 = vmul.f32 %v368, %v370
    %v372 = vadd.f32 %v368, %v371
    %vm373 = vweird.f32 %v367
    %vm374 = vweird.f32 %v368
    %vm375 = vmor %vm373, %vm374
    %v376 = vsel %vm375, %v368, %v372
    %v377 = vand.u32 2147483647, %v367
    %vm378 = vcmp.eq.f32.partialorder %v377, 8.507059e+37
    %v379 = vand.u32 %v367, 2147483648
    %v380 = vor.u32 1.1754944e-38, %v379
    %v381 = vsel %vm378, %v380, %v376
    %v382 = vmul.f32 1.0, %v381
    %384 = vrot.lane.b32.xlu0 %v361, 64
    %v385 = vpop.permute.xlu0 %384
    %v387 = vmul.f32 %v382, %v385
    %389 = vrot.lane.b32.xlu0 %v387, 64
    %v390 = vpop.permute.xlu0 %389
    %v392 = vadd.f32 %v342, %v390
    %v393 = vtanh.pop %v392
    %v394 = vsub.f32 1.0, %v382
    %396 = vrot.lane.b32.xlu0 %v393, 96
    %v397 = vpop.permute.xlu0 %396
    %v399 = vmul.f32 %v394, %v397
    %v400 = vmul.f32 %v382, %v245
    %v401 = vadd.f32 %v399, %v400
    %403 = vrot.lane.b32.xlu0 %v401, 96
    %v404 = vpop.permute.xlu0 %403
    %v405 = vsel %vm183, %v404, 0
    %407 = vmatpush.msra.mxu0 0.0
    %408 = vmatpush.msra.mxu0 0.0
    %409 = vmatpush.msra.mxu0 0.0
    %410 = vmatpush.msra.mxu0 0.0
    %411 = vmatpush.msra.mxu0 0.0
    %412 = vmatpush.msra.mxu0 0.0
    %413 = vmatpush.msra.mxu0 0.0
    %414 = vmatpush.msra.mxu0 0.0
    %415 = vmatpush.msra.mxu0 0.0
    %416 = vmatpush.msra.mxu0 0.0
    %417 = vmatpush.msra.mxu0 0.0
    %418 = vmatpush.msra.mxu0 0.0
    %419 = vmatpush.msra.mxu0 %v130
    %420 = vmatpush.msra.mxu0 %v129
    %421 = vmatpush.msra.mxu0 %v128
    %422 = vmatpush.msra.mxu0 %v127
    %423 = vmatmul.f32.gmra.mxu0 %v405
    %v424 = vpop.f32.mrf.mxu0
    %v425 = vadd.f32 0.0, %v424
    %426 = vdwg.mxu0
    %428 = vrot.lane.b32.xlu0 %v341, 96
    %v429 = vpop.permute.xlu0 %428
    %v430 = vsel %vm183, %v429, 0
    %432 = vmatpush.msra.mxu0 0.0
    %433 = vmatpush.msra.mxu0 0.0
    %434 = vmatpush.msra.mxu0 0.0
    %435 = vmatpush.msra.mxu0 0.0
    %436 = vmatpush.msra.mxu0 0.0
    %437 = vmatpush.msra.mxu0 0.0
    %438 = vmatpush.msra.mxu0 0.0
    %439 = vmatpush.msra.mxu0 0.0
    %440 = vmatpush.msra.mxu0 0.0
    %441 = vmatpush.msra.mxu0 0.0
    %442 = vmatpush.msra.mxu0 0.0
    %443 = vmatpush.msra.mxu0 0.0
    %444 = vmatpush.msra.mxu0 %v134
    %445 = vmatpush.msra.mxu0 %v133
    %446 = vmatpush.msra.mxu0 %v132
    %447 = vmatpush.msra.mxu0 %v131
    %448 = vmatmul.f32.gmra.mxu0 %v430
    %v449 = vpop.f32.mrf.mxu0
    %v450 = vadd.f32 0.0, %v449
    %451 = vdwg.mxu0
    %v452 = vadd.f32 %v425, %v450
    %v453 = vadd.f32 %v452, %v293
    %v454 = vxor.u32 %v453, 2147483648
    %v455 = vmul.f32 %v454, 1.442695
    %v456 = vpow.pop %v455
    %v457 = vadd.f32 %v456, 1.0
    %v458 = vrcp.pop %v457
    %v459 = vmul.f32 %v457, %v458
    %v460 = vsub.f32 1.0, %v459
    %v461 = vmul.f32 %v458, %v460
    %v462 = vadd.f32 %v458, %v461
    %vm463 = vweird.f32 %v457
    %vm464 = vweird.f32 %v458
    %vm465 = vmor %vm463, %vm464
    %v466 = vsel %vm465, %v458, %v462
    %v467 = vand.u32 2147483647, %v457
    %vm468 = vcmp.eq.f32.partialorder %v467, 8.507059e+37
    %v469 = vand.u32 %v457, 2147483648
    %v470 = vor.u32 1.1754944e-38, %v469
    %v471 = vsel %vm468, %v470, %v466
    %v472 = vmul.f32 1.0, %v471
    %v473 = vadd.f32 %v425, %v316
    %v474 = vadd.f32 %v450, %v320
    %476 = vrot.lane.b32.xlu0 %v474, 64
    %v477 = vpop.permute.xlu0 %476
    %v479 = vmul.f32 %v472, %v477
    %481 = vrot.lane.b32.xlu0 %v479, 64
    %v482 = vpop.permute.xlu0 %481
    %v484 = vadd.f32 %v473, %v482
    %v485 = vtanh.pop %v484
    %v486 = vsub.f32 1.0, %v472
    %488 = vrot.lane.b32.xlu0 %v485, 96
    %v489 = vpop.permute.xlu0 %488
    %v491 = vmul.f32 %v486, %v489
    %v492 = vmul.f32 %v472, %v341
    %v493 = vadd.f32 %v491, %v492
    %v494 = vld [vmem:[#allocation2 + $0x4] sm:$0x3]
    %495 = vmatpush.msra.mxu0 0.0
    %496 = vmatpush.msra.mxu0 0.0
    %497 = vmatpush.msra.mxu0 0.0
    %498 = vmatpush.msra.mxu0 0.0
    %499 = vmatpush.msra.mxu0 0.0
    %500 = vmatpush.msra.mxu0 0.0
    %501 = vmatpush.msra.mxu0 0.0
    %502 = vmatpush.msra.mxu0 0.0
    %503 = vmatpush.msra.mxu0 0.0
    %504 = vmatpush.msra.mxu0 0.0
    %505 = vmatpush.msra.mxu0 0.0
    %506 = vmatpush.msra.mxu0 0.0
    %507 = vmatpush.msra.mxu0 %v126
    %508 = vmatpush.msra.mxu0 %v125
    %509 = vmatpush.msra.mxu0 %v124
    %510 = vmatpush.msra.mxu0 %v123
    %511 = vmatmul.f32.gmra.mxu0 %v405
    %v512 = vpop.f32.mrf.mxu0
    %v513 = vadd.f32 %v181, %v512
    %514 = vdwg.mxu0
    %v515 = vadd.f32 %v494, %v513
    %v516 = vxor.u32 %v515, 2147483648
    %v517 = vmul.f32 %v516, 1.442695
    %v518 = vpow.pop %v517
    %v519 = vadd.f32 %v518, 1.0
    %v520 = vrcp.pop %v519
    %v521 = vmul.f32 %v519, %v520
    %v522 = vsub.f32 1.0, %v521
    %v523 = vmul.f32 %v520, %v522
    %v524 = vadd.f32 %v520, %v523
    %vm525 = vweird.f32 %v519
    %vm526 = vweird.f32 %v520
    %vm527 = vmor %vm525, %vm526
    %v528 = vsel %vm527, %v520, %v524
    %v529 = vand.u32 2147483647, %v519
    %vm530 = vcmp.eq.f32.partialorder %v529, 8.507059e+37
    %v531 = vand.u32 %v519, 2147483648
    %v532 = vor.u32 1.1754944e-38, %v531
    %v533 = vsel %vm530, %v532, %v528
    %v534 = vmul.f32 1.0, %v533
    %536 = vrot.lane.b32.xlu0 %v513, 64
    %v537 = vpop.permute.xlu0 %536
    %v539 = vmul.f32 %v534, %v537
    %541 = vrot.lane.b32.xlu0 %v539, 64
    %v542 = vpop.permute.xlu0 %541
    %v544 = vadd.f32 %v494, %v542
    %v545 = vtanh.pop %v544
    %v546 = vsub.f32 1.0, %v534
    %548 = vrot.lane.b32.xlu0 %v545, 96
    %v549 = vpop.permute.xlu0 %548
    %v551 = vmul.f32 %v546, %v549
    %v552 = vmul.f32 %v534, %v401
    %v553 = vadd.f32 %v551, %v552
    %555 = vrot.lane.b32.xlu0 %v553, 96
    %v556 = vpop.permute.xlu0 %555
    %v557 = vsel %vm183, %v556, 0
    %559 = vmatpush.msra.mxu0 0.0
    %560 = vmatpush.msra.mxu0 0.0
    %561 = vmatpush.msra.mxu0 0.0
    %562 = vmatpush.msra.mxu0 0.0
    %563 = vmatpush.msra.mxu0 0.0
    %564 = vmatpush.msra.mxu0 0.0
    %565 = vmatpush.msra.mxu0 0.0
    %566 = vmatpush.msra.mxu0 0.0
    %567 = vmatpush.msra.mxu0 0.0
    %568 = vmatpush.msra.mxu0 0.0
    %569 = vmatpush.msra.mxu0 0.0
    %570 = vmatpush.msra.mxu0 0.0
    %571 = vmatpush.msra.mxu0 %v130
    %572 = vmatpush.msra.mxu0 %v129
    %573 = vmatpush.msra.mxu0 %v128
    %574 = vmatpush.msra.mxu0 %v127
    %575 = vmatmul.f32.gmra.mxu0 %v557
    %v576 = vpop.f32.mrf.mxu0
    %v577 = vadd.f32 0.0, %v576
    %578 = vdwg.mxu0
    %580 = vrot.lane.b32.xlu0 %v493, 96
    %v581 = vpop.permute.xlu0 %580
    %v582 = vsel %vm183, %v581, 0
    %584 = vmatpush.msra.mxu0 0.0
    %585 = vmatpush.msra.mxu0 0.0
    %586 = vmatpush.msra.mxu0 0.0
    %587 = vmatpush.msra.mxu0 0.0
    %588 = vmatpush.msra.mxu0 0.0
    %589 = vmatpush.msra.mxu0 0.0
    %590 = vmatpush.msra.mxu0 0.0
    %591 = vmatpush.msra.mxu0 0.0
    %592 = vmatpush.msra.mxu0 0.0
    %593 = vmatpush.msra.mxu0 0.0
    %594 = vmatpush.msra.mxu0 0.0
    %595 = vmatpush.msra.mxu0 0.0
    %596 = vmatpush.msra.mxu0 %v134
    %597 = vmatpush.msra.mxu0 %v133
    %598 = vmatpush.msra.mxu0 %v132
    %599 = vmatpush.msra.mxu0 %v131
    %600 = vmatmul.f32.gmra.mxu0 %v582
    %v601 = vpop.f32.mrf.mxu0
    %v602 = vadd.f32 0.0, %v601
    %603 = vdwg.mxu0
    %v604 = vadd.f32 %v577, %v602
    %v605 = vadd.f32 %v604, %v293
    %v606 = vxor.u32 %v605, 2147483648
    %v607 = vmul.f32 %v606, 1.442695
    %v608 = vpow.pop %v607
    %v609 = vadd.f32 %v608, 1.0
    %v610 = vrcp.pop %v609
    %v611 = vmul.f32 %v609, %v610
    %v612 = vsub.f32 1.0, %v611
    %v613 = vmul.f32 %v610, %v612
    %v614 = vadd.f32 %v610, %v613
    %vm615 = vweird.f32 %v609
    %vm616 = vweird.f32 %v610
    %vm617 = vmor %vm615, %vm616
    %v618 = vsel %vm617, %v610, %v614
    %v619 = vand.u32 2147483647, %v609
    %vm620 = vcmp.eq.f32.partialorder %v619, 8.507059e+37
    %v621 = vand.u32 %v609, 2147483648
    %v622 = vor.u32 1.1754944e-38, %v621
    %v623 = vsel %vm620, %v622, %v618
    %v624 = vmul.f32 1.0, %v623
    %v625 = vadd.f32 %v577, %v316
    %v626 = vadd.f32 %v602, %v320
    %628 = vrot.lane.b32.xlu0 %v626, 64
    %v629 = vpop.permute.xlu0 %628
    %v631 = vmul.f32 %v624, %v629
    %633 = vrot.lane.b32.xlu0 %v631, 64
    %v634 = vpop.permute.xlu0 %633
    %v636 = vadd.f32 %v625, %v634
    %v637 = vtanh.pop %v636
    %v638 = vsub.f32 1.0, %v624
    %640 = vrot.lane.b32.xlu0 %v637, 96
    %v641 = vpop.permute.xlu0 %640
    %v643 = vmul.f32 %v638, %v641
    %v644 = vmul.f32 %v624, %v493
    %v645 = vadd.f32 %v643, %v644
    %v646 = vld [vmem:[#allocation2 + $0x6] sm:$0x3]
    %647 = vmatpush.msra.mxu0 0.0
    %648 = vmatpush.msra.mxu0 0.0
    %649 = vmatpush.msra.mxu0 0.0
    %650 = vmatpush.msra.mxu0 0.0
    %651 = vmatpush.msra.mxu0 0.0
    %652 = vmatpush.msra.mxu0 0.0
    %653 = vmatpush.msra.mxu0 0.0
    %654 = vmatpush.msra.mxu0 0.0
    %655 = vmatpush.msra.mxu0 0.0
    %656 = vmatpush.msra.mxu0 0.0
    %657 = vmatpush.msra.mxu0 0.0
    %658 = vmatpush.msra.mxu0 0.0
    %659 = vmatpush.msra.mxu0 %v126
    %660 = vmatpush.msra.mxu0 %v125
    %661 = vmatpush.msra.mxu0 %v124
    %662 = vmatpush.msra.mxu0 %v123
    %663 = vmatmul.f32.gmra.mxu0 %v557
    %v664 = vpop.f32.mrf.mxu0
    %v665 = vadd.f32 %v181, %v664
    %666 = vdwg.mxu0
    %v667 = vadd.f32 %v646, %v665
    %v668 = vxor.u32 %v667, 2147483648
    %v669 = vmul.f32 %v668, 1.442695
    %v670 = vpow.pop %v669
    %v671 = vadd.f32 %v670, 1.0
    %v672 = vrcp.pop %v671
    %v673 = vmul.f32 %v671, %v672
    %v674 = vsub.f32 1.0, %v673
    %v675 = vmul.f32 %v672, %v674
    %v676 = vadd.f32 %v672, %v675
    %vm677 = vweird.f32 %v671
    %vm678 = vweird.f32 %v672
    %vm679 = vmor %vm677, %vm678
    %v680 = vsel %vm679, %v672, %v676
    %v681 = vand.u32 2147483647, %v671
    %vm682 = vcmp.eq.f32.partialorder %v681, 8.507059e+37
    %v683 = vand.u32 %v671, 2147483648
    %v684 = vor.u32 1.1754944e-38, %v683
    %v685 = vsel %vm682, %v684, %v680
    %v686 = vmul.f32 1.0, %v685
    %688 = vrot.lane.b32.xlu0 %v665, 64
    %v689 = vpop.permute.xlu0 %688
    %v691 = vmul.f32 %v686, %v689
    %693 = vrot.lane.b32.xlu0 %v691, 64
    %v694 = vpop.permute.xlu0 %693
    %v696 = vadd.f32 %v646, %v694
    %v697 = vtanh.pop %v696
    %v698 = vsub.f32 1.0, %v686
    %700 = vrot.lane.b32.xlu0 %v697, 96
    %v701 = vpop.permute.xlu0 %700
    %v703 = vmul.f32 %v698, %v701
    %v704 = vmul.f32 %v686, %v553
    %v705 = vadd.f32 %v703, %v704
    %707 = vrot.lane.b32.xlu0 %v705, 96
    %v708 = vpop.permute.xlu0 %707
    %v709 = vsel %vm183, %v708, 0
    %711 = vmatpush.msra.mxu0 0.0
    %712 = vmatpush.msra.mxu0 0.0
    %713 = vmatpush.msra.mxu0 0.0
    %714 = vmatpush.msra.mxu0 0.0
    %715 = vmatpush.msra.mxu0 0.0
    %716 = vmatpush.msra.mxu0 0.0
    %717 = vmatpush.msra.mxu0 0.0
    %718 = vmatpush.msra.mxu0 0.0
    %719 = vmatpush.msra.mxu0 0.0
    %720 = vmatpush.msra.mxu0 0.0
    %721 = vmatpush.msra.mxu0 0.0
    %722 = vmatpush.msra.mxu0 0.0
    %723 = vmatpush.msra.mxu0 %v130
    %724 = vmatpush.msra.mxu0 %v129
    %725 = vmatpush.msra.mxu0 %v128
    %726 = vmatpush.msra.mxu0 %v127
    %727 = vmatmul.f32.gmra.mxu0 %v709
    %v728 = vpop.f32.mrf.mxu0
    %v729 = vadd.f32 0.0, %v728
    %730 = vdwg.mxu0
    %732 = vrot.lane.b32.xlu0 %v645, 96
    %v733 = vpop.permute.xlu0 %732
    %v734 = vsel %vm183, %v733, 0
    %736 = vmatpush.msra.mxu0 0.0
    %737 = vmatpush.msra.mxu0 0.0
    %738 = vmatpush.msra.mxu0 0.0
    %739 = vmatpush.msra.mxu0 0.0
    %740 = vmatpush.msra.mxu0 0.0
    %741 = vmatpush.msra.mxu0 0.0
    %742 = vmatpush.msra.mxu0 0.0
    %743 = vmatpush.msra.mxu0 0.0
    %744 = vmatpush.msra.mxu0 0.0
    %745 = vmatpush.msra.mxu0 0.0
    %746 = vmatpush.msra.mxu0 0.0
    %747 = vmatpush.msra.mxu0 0.0
    %748 = vmatpush.msra.mxu0 %v134
    %749 = vmatpush.msra.mxu0 %v133
    %750 = vmatpush.msra.mxu0 %v132
    %751 = vmatpush.msra.mxu0 %v131
    %752 = vmatmul.f32.gmra.mxu0 %v734
    %v753 = vpop.f32.mrf.mxu0
    %v754 = vadd.f32 0.0, %v753
    %755 = vdwg.mxu0
    %v756 = vadd.f32 %v729, %v754
    %v757 = vadd.f32 %v756, %v293
    %v758 = vxor.u32 %v757, 2147483648
    %v759 = vmul.f32 %v758, 1.442695
    %v760 = vpow.pop %v759
    %v761 = vadd.f32 %v760, 1.0
    %v762 = vrcp.pop %v761
    %v763 = vmul.f32 %v761, %v762
    %v764 = vsub.f32 1.0, %v763
    %v765 = vmul.f32 %v762, %v764
    %v766 = vadd.f32 %v762, %v765
    %vm767 = vweird.f32 %v761
    %vm768 = vweird.f32 %v762
    %vm769 = vmor %vm767, %vm768
    %v770 = vsel %vm769, %v762, %v766
    %v771 = vand.u32 2147483647, %v761
    %vm772 = vcmp.eq.f32.partialorder %v771, 8.507059e+37
    %v773 = vand.u32 %v761, 2147483648
    %v774 = vor.u32 1.1754944e-38, %v773
    %v775 = vsel %vm772, %v774, %v770
    %v776 = vmul.f32 1.0, %v775
    %v777 = vadd.f32 %v729, %v316
    %v778 = vadd.f32 %v754, %v320
    %780 = vrot.lane.b32.xlu0 %v778, 64
    %v781 = vpop.permute.xlu0 %780
    %v783 = vmul.f32 %v776, %v781
    %785 = vrot.lane.b32.xlu0 %v783, 64
    %v786 = vpop.permute.xlu0 %785
    %v788 = vadd.f32 %v777, %v786
    %v789 = vtanh.pop %v788
    %v790 = vsub.f32 1.0, %v776
    %792 = vrot.lane.b32.xlu0 %v789, 96
    %v793 = vpop.permute.xlu0 %792
    %v795 = vmul.f32 %v790, %v793
    %v796 = vmul.f32 %v776, %v645
    %v797 = vadd.f32 %v795, %v796
    %v798 = vld [vmem:[#allocation2 + $0x8] sm:$0x3]
    %799 = vmatpush.msra.mxu0 0.0
    %800 = vmatpush.msra.mxu0 0.0
    %801 = vmatpush.msra.mxu0 0.0
    %802 = vmatpush.msra.mxu0 0.0
    %803 = vmatpush.msra.mxu0 0.0
    %804 = vmatpush.msra.mxu0 0.0
    %805 = vmatpush.msra.mxu0 0.0
    %806 = vmatpush.msra.mxu0 0.0
    %807 = vmatpush.msra.mxu0 0.0
    %808 = vmatpush.msra.mxu0 0.0
    %809 = vmatpush.msra.mxu0 0.0
    %810 = vmatpush.msra.mxu0 0.0
    %811 = vmatpush.msra.mxu0 %v126
    %812 = vmatpush.msra.mxu0 %v125
    %813 = vmatpush.msra.mxu0 %v124
    %814 = vmatpush.msra.mxu0 %v123
    %815 = vmatmul.f32.gmra.mxu0 %v709
    %v816 = vpop.f32.mrf.mxu0
    %v817 = vadd.f32 %v181, %v816
    %818 = vdwg.mxu0
    %v819 = vadd.f32 %v798, %v817
    %v820 = vxor.u32 %v819, 2147483648
    %v821 = vmul.f32 %v820, 1.442695
    %v822 = vpow.pop %v821
    %v823 = vadd.f32 %v822, 1.0
    %v824 = vrcp.pop %v823
    %v825 = vmul.f32 %v823, %v824
    %v826 = vsub.f32 1.0, %v825
    %v827 = vmul.f32 %v824, %v826
    %v828 = vadd.f32 %v824, %v827
    %vm829 = vweird.f32 %v823
    %vm830 = vweird.f32 %v824
    %vm831 = vmor %vm829, %vm830
    %v832 = vsel %vm831, %v824, %v828
    %v833 = vand.u32 2147483647, %v823
    %vm834 = vcmp.eq.f32.partialorder %v833, 8.507059e+37
    %v835 = vand.u32 %v823, 2147483648
    %v836 = vor.u32 1.1754944e-38, %v835
    %v837 = vsel %vm834, %v836, %v832
    %v838 = vmul.f32 1.0, %v837
    %840 = vrot.lane.b32.xlu0 %v817, 64
    %v841 = vpop.permute.xlu0 %840
    %v843 = vmul.f32 %v838, %v841
    %845 = vrot.lane.b32.xlu0 %v843, 64
    %v846 = vpop.permute.xlu0 %845
    %v848 = vadd.f32 %v798, %v846
    %v849 = vtanh.pop %v848
    %v850 = vsub.f32 1.0, %v838
    %852 = vrot.lane.b32.xlu0 %v849, 96
    %v853 = vpop.permute.xlu0 %852
    %v855 = vmul.f32 %v850, %v853
    %v856 = vmul.f32 %v838, %v705
    %v857 = vadd.f32 %v855, %v856
    %859 = vrot.lane.b32.xlu0 %v857, 96
    %v860 = vpop.permute.xlu0 %859
    %v861 = vsel %vm183, %v860, 0
    %863 = vmatpush.msra.mxu0 0.0
    %864 = vmatpush.msra.mxu0 0.0
    %865 = vmatpush.msra.mxu0 0.0
    %866 = vmatpush.msra.mxu0 0.0
    %867 = vmatpush.msra.mxu0 0.0
    %868 = vmatpush.msra.mxu0 0.0
    %869 = vmatpush.msra.mxu0 0.0
    %870 = vmatpush.msra.mxu0 0.0
    %871 = vmatpush.msra.mxu0 0.0
    %872 = vmatpush.msra.mxu0 0.0
    %873 = vmatpush.msra.mxu0 0.0
    %874 = vmatpush.msra.mxu0 0.0
    %875 = vmatpush.msra.mxu0 %v130
    %876 = vmatpush.msra.mxu0 %v129
    %877 = vmatpush.msra.mxu0 %v128
    %878 = vmatpush.msra.mxu0 %v127
    %879 = vmatmul.f32.gmra.mxu0 %v861
    %v880 = vpop.f32.mrf.mxu0
    %v881 = vadd.f32 0.0, %v880
    %882 = vdwg.mxu0
    %884 = vrot.lane.b32.xlu0 %v797, 96
    %v885 = vpop.permute.xlu0 %884
    %v886 = vsel %vm183, %v885, 0
    %888 = vmatpush.msra.mxu0 0.0
    %889 = vmatpush.msra.mxu0 0.0
    %890 = vmatpush.msra.mxu0 0.0
    %891 = vmatpush.msra.mxu0 0.0
    %892 = vmatpush.msra.mxu0 0.0
    %893 = vmatpush.msra.mxu0 0.0
    %894 = vmatpush.msra.mxu0 0.0
    %895 = vmatpush.msra.mxu0 0.0
    %896 = vmatpush.msra.mxu0 0.0
    %897 = vmatpush.msra.mxu0 0.0
    %898 = vmatpush.msra.mxu0 0.0
    %899 = vmatpush.msra.mxu0 0.0
    %900 = vmatpush.msra.mxu0 %v134
    %901 = vmatpush.msra.mxu0 %v133
    %902 = vmatpush.msra.mxu0 %v132
    %903 = vmatpush.msra.mxu0 %v131
    %904 = vmatmul.f32.gmra.mxu0 %v886
    %v905 = vpop.f32.mrf.mxu0
    %v906 = vadd.f32 0.0, %v905
    %907 = vdwg.mxu0
    %v908 = vadd.f32 %v881, %v906
    %v909 = vadd.f32 %v908, %v293
    %v910 = vxor.u32 %v909, 2147483648
    %v911 = vmul.f32 %v910, 1.442695
    %v912 = vpow.pop %v911
    %v913 = vadd.f32 %v912, 1.0
    %v914 = vrcp.pop %v913
    %v915 = vmul.f32 %v913, %v914
    %v916 = vsub.f32 1.0, %v915
    %v917 = vmul.f32 %v914, %v916
    %v918 = vadd.f32 %v914, %v917
    %vm919 = vweird.f32 %v913
    %vm920 = vweird.f32 %v914
    %vm921 = vmor %vm919, %vm920
    %v922 = vsel %vm921, %v914, %v918
    %v923 = vand.u32 2147483647, %v913
    %vm924 = vcmp.eq.f32.partialorder %v923, 8.507059e+37
    %v925 = vand.u32 %v913, 2147483648
    %v926 = vor.u32 1.1754944e-38, %v925
    %v927 = vsel %vm924, %v926, %v922
    %v928 = vmul.f32 1.0, %v927
    %v929 = vadd.f32 %v881, %v316
    %v930 = vadd.f32 %v906, %v320
    %932 = vrot.lane.b32.xlu0 %v930, 64
    %v933 = vpop.permute.xlu0 %932
    %v935 = vmul.f32 %v928, %v933
    %937 = vrot.lane.b32.xlu0 %v935, 64
    %v938 = vpop.permute.xlu0 %937
    %v940 = vadd.f32 %v929, %v938
    %v941 = vtanh.pop %v940
    %v942 = vsub.f32 1.0, %v928
    %944 = vrot.lane.b32.xlu0 %v941, 96
    %v945 = vpop.permute.xlu0 %944
    %v947 = vmul.f32 %v942, %v945
    %v948 = vmul.f32 %v928, %v797
    %v949 = vadd.f32 %v947, %v948
    %v950 = vld [vmem:[#allocation2 + $0xa] sm:$0x3]
    %951 = vmatpush.msra.mxu0 0.0
    %952 = vmatpush.msra.mxu0 0.0
    %953 = vmatpush.msra.mxu0 0.0
    %954 = vmatpush.msra.mxu0 0.0
    %955 = vmatpush.msra.mxu0 0.0
    %956 = vmatpush.msra.mxu0 0.0
    %957 = vmatpush.msra.mxu0 0.0
    %958 = vmatpush.msra.mxu0 0.0
    %959 = vmatpush.msra.mxu0 0.0
    %960 = vmatpush.msra.mxu0 0.0
    %961 = vmatpush.msra.mxu0 0.0
    %962 = vmatpush.msra.mxu0 0.0
    %963 = vmatpush.msra.mxu0 %v126
    %964 = vmatpush.msra.mxu0 %v125
    %965 = vmatpush.msra.mxu0 %v124
    %966 = vmatpush.msra.mxu0 %v123
    %967 = vmatmul.f32.gmra.mxu0 %v861
    %v968 = vpop.f32.mrf.mxu0
    %v969 = vadd.f32 %v181, %v968
    %970 = vdwg.mxu0
    %v971 = vadd.f32 %v950, %v969
    %v972 = vxor.u32 %v971, 2147483648
    %v973 = vmul.f32 %v972, 1.442695
    %v974 = vpow.pop %v973
    %v975 = vadd.f32 %v974, 1.0
    %v976 = vrcp.pop %v975
    %v977 = vmul.f32 %v975, %v976
    %v978 = vsub.f32 1.0, %v977
    %v979 = vmul.f32 %v976, %v978
    %v980 = vadd.f32 %v976, %v979
    %vm981 = vweird.f32 %v975
    %vm982 = vweird.f32 %v976
    %vm983 = vmor %vm981, %vm982
    %v984 = vsel %vm983, %v976, %v980
    %v985 = vand.u32 2147483647, %v975
    %vm986 = vcmp.eq.f32.partialorder %v985, 8.507059e+37
    %v987 = vand.u32 %v975, 2147483648
    %v988 = vor.u32 1.1754944e-38, %v987
    %v989 = vsel %vm986, %v988, %v984
    %v990 = vmul.f32 1.0, %v989
    %992 = vrot.lane.b32.xlu0 %v969, 64
    %v993 = vpop.permute.xlu0 %992
    %v995 = vmul.f32 %v990, %v993
    %997 = vrot.lane.b32.xlu0 %v995, 64
    %v998 = vpop.permute.xlu0 %997
    %v1000 = vadd.f32 %v950, %v998
    %v1001 = vtanh.pop %v1000
    %v1002 = vsub.f32 1.0, %v990
    %1004 = vrot.lane.b32.xlu0 %v1001, 96
    %v1005 = vpop.permute.xlu0 %1004
    %v1007 = vmul.f32 %v1002, %v1005
    %v1008 = vmul.f32 %v990, %v857
    %v1009 = vadd.f32 %v1007, %v1008
    %1011 = vrot.lane.b32.xlu0 %v1009, 96
    %v1012 = vpop.permute.xlu0 %1011
    %v1013 = vsel %vm183, %v1012, 0
    %1015 = vmatpush.msra.mxu0 0.0
    %1016 = vmatpush.msra.mxu0 0.0
    %1017 = vmatpush.msra.mxu0 0.0
    %1018 = vmatpush.msra.mxu0 0.0
    %1019 = vmatpush.msra.mxu0 0.0
    %1020 = vmatpush.msra.mxu0 0.0
    %1021 = vmatpush.msra.mxu0 0.0
    %1022 = vmatpush.msra.mxu0 0.0
    %1023 = vmatpush.msra.mxu0 0.0
    %1024 = vmatpush.msra.mxu0 0.0
    %1025 = vmatpush.msra.mxu0 0.0
    %1026 = vmatpush.msra.mxu0 0.0
    %1027 = vmatpush.msra.mxu0 %v130
    %1028 = vmatpush.msra.mxu0 %v129
    %1029 = vmatpush.msra.mxu0 %v128
    %1030 = vmatpush.msra.mxu0 %v127
    %1031 = vmatmul.f32.gmra.mxu0 %v1013
    %v1032 = vpop.f32.mrf.mxu0
    %v1033 = vadd.f32 0.0, %v1032
    %1034 = vdwg.mxu0
    %1036 = vrot.lane.b32.xlu0 %v949, 96
    %v1037 = vpop.permute.xlu0 %1036
    %v1038 = vsel %vm183, %v1037, 0
    %1040 = vmatpush.msra.mxu0 0.0
    %1041 = vmatpush.msra.mxu0 0.0
    %1042 = vmatpush.msra.mxu0 0.0
    %1043 = vmatpush.msra.mxu0 0.0
    %1044 = vmatpush.msra.mxu0 0.0
    %1045 = vmatpush.msra.mxu0 0.0
    %1046 = vmatpush.msra.mxu0 0.0
    %1047 = vmatpush.msra.mxu0 0.0
    %1048 = vmatpush.msra.mxu0 0.0
    %1049 = vmatpush.msra.mxu0 0.0
    %1050 = vmatpush.msra.mxu0 0.0
    %1051 = vmatpush.msra.mxu0 0.0
    %1052 = vmatpush.msra.mxu0 %v134
    %1053 = vmatpush.msra.mxu0 %v133
    %1054 = vmatpush.msra.mxu0 %v132
    %1055 = vmatpush.msra.mxu0 %v131
    %1056 = vmatmul.f32.gmra.mxu0 %v1038
    %v1057 = vpop.f32.mrf.mxu0
    %v1058 = vadd.f32 0.0, %v1057
    %1059 = vdwg.mxu0
    %v1060 = vadd.f32 %v1033, %v1058
    %v1061 = vadd.f32 %v1060, %v293
    %v1062 = vxor.u32 %v1061, 2147483648
    %v1063 = vmul.f32 %v1062, 1.442695
    %v1064 = vpow.pop %v1063
    %v1065 = vadd.f32 %v1064, 1.0
    %v1066 = vrcp.pop %v1065
    %v1067 = vmul.f32 %v1065, %v1066
    %v1068 = vsub.f32 1.0, %v1067
    %v1069 = vmul.f32 %v1066, %v1068
    %v1070 = vadd.f32 %v1066, %v1069
    %vm1071 = vweird.f32 %v1065
    %vm1072 = vweird.f32 %v1066
    %vm1073 = vmor %vm1071, %vm1072
    %v1074 = vsel %vm1073, %v1066, %v1070
    %v1075 = vand.u32 2147483647, %v1065
    %vm1076 = vcmp.eq.f32.partialorder %v1075, 8.507059e+37
    %v1077 = vand.u32 %v1065, 2147483648
    %v1078 = vor.u32 1.1754944e-38, %v1077
    %v1079 = vsel %vm1076, %v1078, %v1074
    %v1080 = vmul.f32 1.0, %v1079
    %v1081 = vadd.f32 %v1033, %v316
    %v1082 = vadd.f32 %v1058, %v320
    %1084 = vrot.lane.b32.xlu0 %v1082, 64
    %v1085 = vpop.permute.xlu0 %1084
    %v1087 = vmul.f32 %v1080, %v1085
    %1089 = vrot.lane.b32.xlu0 %v1087, 64
    %v1090 = vpop.permute.xlu0 %1089
    %v1092 = vadd.f32 %v1081, %v1090
    %v1093 = vtanh.pop %v1092
    %v1094 = vsub.f32 1.0, %v1080
    %1096 = vrot.lane.b32.xlu0 %v1093, 96
    %v1097 = vpop.permute.xlu0 %1096
    %v1099 = vmul.f32 %v1094, %v1097
    %v1100 = vmul.f32 %v1080, %v949
    %v1101 = vadd.f32 %v1099, %v1100
    %v1102 = vld [vmem:[#allocation2 + $0xc] sm:$0x3]
    %1103 = vmatpush.msra.mxu0 0.0
    %1104 = vmatpush.msra.mxu0 0.0
    %1105 = vmatpush.msra.mxu0 0.0
    %1106 = vmatpush.msra.mxu0 0.0
    %1107 = vmatpush.msra.mxu0 0.0
    %1108 = vmatpush.msra.mxu0 0.0
    %1109 = vmatpush.msra.mxu0 0.0
    %1110 = vmatpush.msra.mxu0 0.0
    %1111 = vmatpush.msra.mxu0 0.0
    %1112 = vmatpush.msra.mxu0 0.0
    %1113 = vmatpush.msra.mxu0 0.0
    %1114 = vmatpush.msra.mxu0 0.0
    %1115 = vmatpush.msra.mxu0 %v126
    %1116 = vmatpush.msra.mxu0 %v125
    %1117 = vmatpush.msra.mxu0 %v124
    %1118 = vmatpush.msra.mxu0 %v123
    %1119 = vmatmul.f32.gmra.mxu0 %v1013
    %v1120 = vpop.f32.mrf.mxu0
    %v1121 = vadd.f32 %v181, %v1120
    %1122 = vdwg.mxu0
    %v1123 = vadd.f32 %v1102, %v1121
    %v1124 = vxor.u32 %v1123, 2147483648
    %v1125 = vmul.f32 %v1124, 1.442695
    %v1126 = vpow.pop %v1125
    %v1127 = vadd.f32 %v1126, 1.0
    %v1128 = vrcp.pop %v1127
    %v1129 = vmul.f32 %v1127, %v1128
    %v1130 = vsub.f32 1.0, %v1129
    %v1131 = vmul.f32 %v1128, %v1130
    %v1132 = vadd.f32 %v1128, %v1131
    %vm1133 = vweird.f32 %v1127
    %vm1134 = vweird.f32 %v1128
    %vm1135 = vmor %vm1133, %vm1134
    %v1136 = vsel %vm1135, %v1128, %v1132
    %v1137 = vand.u32 2147483647, %v1127
    %vm1138 = vcmp.eq.f32.partialorder %v1137, 8.507059e+37
    %v1139 = vand.u32 %v1127, 2147483648
    %v1140 = vor.u32 1.1754944e-38, %v1139
    %v1141 = vsel %vm1138, %v1140, %v1136
    %v1142 = vmul.f32 1.0, %v1141
    %1144 = vrot.lane.b32.xlu0 %v1121, 64
    %v1145 = vpop.permute.xlu0 %1144
    %v1147 = vmul.f32 %v1142, %v1145
    %1149 = vrot.lane.b32.xlu0 %v1147, 64
    %v1150 = vpop.permute.xlu0 %1149
    %v1152 = vadd.f32 %v1102, %v1150
    %v1153 = vtanh.pop %v1152
    %v1154 = vsub.f32 1.0, %v1142
    %1156 = vrot.lane.b32.xlu0 %v1153, 96
    %v1157 = vpop.permute.xlu0 %1156
    %v1159 = vmul.f32 %v1154, %v1157
    %v1160 = vmul.f32 %v1142, %v1009
    %v1161 = vadd.f32 %v1159, %v1160
    %1163 = vrot.lane.b32.xlu0 %v1161, 96
    %v1164 = vpop.permute.xlu0 %1163
    %v1165 = vsel %vm183, %v1164, 0
    %1167 = vmatpush.msra.mxu0 0.0
    %1168 = vmatpush.msra.mxu0 0.0
    %1169 = vmatpush.msra.mxu0 0.0
    %1170 = vmatpush.msra.mxu0 0.0
    %1171 = vmatpush.msra.mxu0 0.0
    %1172 = vmatpush.msra.mxu0 0.0
    %1173 = vmatpush.msra.mxu0 0.0
    %1174 = vmatpush.msra.mxu0 0.0
    %1175 = vmatpush.msra.mxu0 0.0
    %1176 = vmatpush.msra.mxu0 0.0
    %1177 = vmatpush.msra.mxu0 0.0
    %1178 = vmatpush.msra.mxu0 0.0
    %1179 = vmatpush.msra.mxu0 %v130
    %1180 = vmatpush.msra.mxu0 %v129
    %1181 = vmatpush.msra.mxu0 %v128
    %1182 = vmatpush.msra.mxu0 %v127
    %1183 = vmatmul.f32.gmra.mxu0 %v1165
    %v1184 = vpop.f32.mrf.mxu0
    %v1185 = vadd.f32 0.0, %v1184
    %1186 = vdwg.mxu0
    %1188 = vrot.lane.b32.xlu0 %v1101, 96
    %v1189 = vpop.permute.xlu0 %1188
    %v1190 = vsel %vm183, %v1189, 0
    %1192 = vmatpush.msra.mxu0 0.0
    %1193 = vmatpush.msra.mxu0 0.0
    %1194 = vmatpush.msra.mxu0 0.0
    %1195 = vmatpush.msra.mxu0 0.0
    %1196 = vmatpush.msra.mxu0 0.0
    %1197 = vmatpush.msra.mxu0 0.0
    %1198 = vmatpush.msra.mxu0 0.0
    %1199 = vmatpush.msra.mxu0 0.0
    %1200 = vmatpush.msra.mxu0 0.0
    %1201 = vmatpush.msra.mxu0 0.0
    %1202 = vmatpush.msra.mxu0 0.0
    %1203 = vmatpush.msra.mxu0 0.0
    %1204 = vmatpush.msra.mxu0 %v134
    %1205 = vmatpush.msra.mxu0 %v133
    %1206 = vmatpush.msra.mxu0 %v132
    %1207 = vmatpush.msra.mxu0 %v131
    %1208 = vmatmul.f32.gmra.mxu0 %v1190
    %v1209 = vpop.f32.mrf.mxu0
    %v1210 = vadd.f32 0.0, %v1209
    %1211 = vdwg.mxu0
    %v1212 = vadd.f32 %v1185, %v1210
    %v1213 = vadd.f32 %v1212, %v293
    %v1214 = vxor.u32 %v1213, 2147483648
    %v1215 = vmul.f32 %v1214, 1.442695
    %v1216 = vpow.pop %v1215
    %v1217 = vadd.f32 %v1216, 1.0
    %v1218 = vrcp.pop %v1217
    %v1219 = vmul.f32 %v1217, %v1218
    %v1220 = vsub.f32 1.0, %v1219
    %v1221 = vmul.f32 %v1218, %v1220
    %v1222 = vadd.f32 %v1218, %v1221
    %vm1223 = vweird.f32 %v1217
    %vm1224 = vweird.f32 %v1218
    %vm1225 = vmor %vm1223, %vm1224
    %v1226 = vsel %vm1225, %v1218, %v1222
    %v1227 = vand.u32 2147483647, %v1217
    %vm1228 = vcmp.eq.f32.partialorder %v1227, 8.507059e+37
    %v1229 = vand.u32 %v1217, 2147483648
    %v1230 = vor.u32 1.1754944e-38, %v1229
    %v1231 = vsel %vm1228, %v1230, %v1226
    %v1232 = vmul.f32 1.0, %v1231
    %v1233 = vadd.f32 %v1185, %v316
    %v1234 = vadd.f32 %v1210, %v320
    %1236 = vrot.lane.b32.xlu0 %v1234, 64
    %v1237 = vpop.permute.xlu0 %1236
    %v1239 = vmul.f32 %v1232, %v1237
    %1241 = vrot.lane.b32.xlu0 %v1239, 64
    %v1242 = vpop.permute.xlu0 %1241
    %v1244 = vadd.f32 %v1233, %v1242
    %v1245 = vtanh.pop %v1244
    %v1246 = vsub.f32 1.0, %v1232
    %1248 = vrot.lane.b32.xlu0 %v1245, 96
    %v1249 = vpop.permute.xlu0 %1248
    %v1251 = vmul.f32 %v1246, %v1249
    %v1252 = vmul.f32 %v1232, %v1101
    %v1253 = vadd.f32 %v1251, %v1252
    %v1254 = vld [vmem:[#allocation2 + $0xe] sm:$0x3]
    %1255 = vmatpush.msra.mxu0 0.0
    %1256 = vmatpush.msra.mxu0 0.0
    %1257 = vmatpush.msra.mxu0 0.0
    %1258 = vmatpush.msra.mxu0 0.0
    %1259 = vmatpush.msra.mxu0 0.0
    %1260 = vmatpush.msra.mxu0 0.0
    %1261 = vmatpush.msra.mxu0 0.0
    %1262 = vmatpush.msra.mxu0 0.0
    %1263 = vmatpush.msra.mxu0 0.0
    %1264 = vmatpush.msra.mxu0 0.0
    %1265 = vmatpush.msra.mxu0 0.0
    %1266 = vmatpush.msra.mxu0 0.0
    %1267 = vmatpush.msra.mxu0 %v126
    %1268 = vmatpush.msra.mxu0 %v125
    %1269 = vmatpush.msra.mxu0 %v124
    %1270 = vmatpush.msra.mxu0 %v123
    %1271 = vmatmul.f32.gmra.mxu0 %v1165
    %v1272 = vpop.f32.mrf.mxu0
    %v1273 = vadd.f32 %v181, %v1272
    %1274 = vdwg.mxu0
    %v1275 = vadd.f32 %v1254, %v1273
    %v1276 = vxor.u32 %v1275, 2147483648
    %v1277 = vmul.f32 %v1276, 1.442695
    %v1278 = vpow.pop %v1277
    %v1279 = vadd.f32 %v1278, 1.0
    %v1280 = vrcp.pop %v1279
    %v1281 = vmul.f32 %v1279, %v1280
    %v1282 = vsub.f32 1.0, %v1281
    %v1283 = vmul.f32 %v1280, %v1282
    %v1284 = vadd.f32 %v1280, %v1283
    %vm1285 = vweird.f32 %v1279
    %vm1286 = vweird.f32 %v1280
    %vm1287 = vmor %vm1285, %vm1286
    %v1288 = vsel %vm1287, %v1280, %v1284
    %v1289 = vand.u32 2147483647, %v1279
    %vm1290 = vcmp.eq.f32.partialorder %v1289, 8.507059e+37
    %v1291 = vand.u32 %v1279, 2147483648
    %v1292 = vor.u32 1.1754944e-38, %v1291
    %v1293 = vsel %vm1290, %v1292, %v1288
    %v1294 = vmul.f32 1.0, %v1293
    %1296 = vrot.lane.b32.xlu0 %v1273, 64
    %v1297 = vpop.permute.xlu0 %1296
    %v1299 = vmul.f32 %v1294, %v1297
    %1301 = vrot.lane.b32.xlu0 %v1299, 64
    %v1302 = vpop.permute.xlu0 %1301
    %v1304 = vadd.f32 %v1254, %v1302
    %v1305 = vtanh.pop %v1304
    %v1306 = vsub.f32 1.0, %v1294
    %1308 = vrot.lane.b32.xlu0 %v1305, 96
    %v1309 = vpop.permute.xlu0 %1308
    %v1311 = vmul.f32 %v1306, %v1309
    %v1312 = vmul.f32 %v1294, %v1161
    %v1313 = vadd.f32 %v1311, %v1312
    %1315 = vrot.lane.b32.xlu0 %v1313, 96
    %v1316 = vpop.permute.xlu0 %1315
    %v1317 = vsel %vm183, %v1316, 0
    %1319 = vmatpush.msra.mxu0 0.0
    %1320 = vmatpush.msra.mxu0 0.0
    %1321 = vmatpush.msra.mxu0 0.0
    %1322 = vmatpush.msra.mxu0 0.0
    %1323 = vmatpush.msra.mxu0 0.0
    %1324 = vmatpush.msra.mxu0 0.0
    %1325 = vmatpush.msra.mxu0 0.0
    %1326 = vmatpush.msra.mxu0 0.0
    %1327 = vmatpush.msra.mxu0 0.0
    %1328 = vmatpush.msra.mxu0 0.0
    %1329 = vmatpush.msra.mxu0 0.0
    %1330 = vmatpush.msra.mxu0 0.0
    %1331 = vmatpush.msra.mxu0 %v130
    %1332 = vmatpush.msra.mxu0 %v129
    %1333 = vmatpush.msra.mxu0 %v128
    %1334 = vmatpush.msra.mxu0 %v127
    %1335 = vmatmul.f32.gmra.mxu0 %v1317
    %v1336 = vpop.f32.mrf.mxu0
    %v1337 = vadd.f32 0.0, %v1336
    %1338 = vdwg.mxu0
    %1340 = vrot.lane.b32.xlu0 %v1253, 96
    %v1341 = vpop.permute.xlu0 %1340
    %v1342 = vsel %vm183, %v1341, 0
    %1344 = vmatpush.msra.mxu0 0.0
    %1345 = vmatpush.msra.mxu0 0.0
    %1346 = vmatpush.msra.mxu0 0.0
    %1347 = vmatpush.msra.mxu0 0.0
    %1348 = vmatpush.msra.mxu0 0.0
    %1349 = vmatpush.msra.mxu0 0.0
    %1350 = vmatpush.msra.mxu0 0.0
    %1351 = vmatpush.msra.mxu0 0.0
    %1352 = vmatpush.msra.mxu0 0.0
    %1353 = vmatpush.msra.mxu0 0.0
    %1354 = vmatpush.msra.mxu0 0.0
    %1355 = vmatpush.msra.mxu0 0.0
    %1356 = vmatpush.msra.mxu0 %v134
    %1357 = vmatpush.msra.mxu0 %v133
    %1358 = vmatpush.msra.mxu0 %v132
    %1359 = vmatpush.msra.mxu0 %v131
    %1360 = vmatmul.f32.gmra.mxu0 %v1342
    %v1361 = vpop.f32.mrf.mxu0
    %v1362 = vadd.f32 0.0, %v1361
    %1363 = vdwg.mxu0
    %v1364 = vadd.f32 %v1337, %v1362
    %v1365 = vadd.f32 %v1364, %v293
    %v1366 = vxor.u32 %v1365, 2147483648
    %v1367 = vmul.f32 %v1366, 1.442695
    %v1368 = vpow.pop %v1367
    %v1369 = vadd.f32 %v1368, 1.0
    %v1370 = vrcp.pop %v1369
    %v1371 = vmul.f32 %v1369, %v1370
    %v1372 = vsub.f32 1.0, %v1371
    %v1373 = vmul.f32 %v1370, %v1372
    %v1374 = vadd.f32 %v1370, %v1373
    %vm1375 = vweird.f32 %v1369
    %vm1376 = vweird.f32 %v1370
    %vm1377 = vmor %vm1375, %vm1376
    %v1378 = vsel %vm1377, %v1370, %v1374
    %v1379 = vand.u32 2147483647, %v1369
    %vm1380 = vcmp.eq.f32.partialorder %v1379, 8.507059e+37
    %v1381 = vand.u32 %v1369, 2147483648
    %v1382 = vor.u32 1.1754944e-38, %v1381
    %v1383 = vsel %vm1380, %v1382, %v1378
    %v1384 = vmul.f32 1.0, %v1383
    %v1385 = vadd.f32 %v1337, %v316
    %v1386 = vadd.f32 %v1362, %v320
    %1388 = vrot.lane.b32.xlu0 %v1386, 64
    %v1389 = vpop.permute.xlu0 %1388
    %v1391 = vmul.f32 %v1384, %v1389
    %1393 = vrot.lane.b32.xlu0 %v1391, 64
    %v1394 = vpop.permute.xlu0 %1393
    %v1396 = vadd.f32 %v1385, %v1394
    %v1397 = vtanh.pop %v1396
    %v1398 = vsub.f32 1.0, %v1384
    %1400 = vrot.lane.b32.xlu0 %v1397, 96
    %v1401 = vpop.permute.xlu0 %1400
    %v1403 = vmul.f32 %v1398, %v1401
    %v1404 = vmul.f32 %v1384, %v1253
    %v1405 = vadd.f32 %v1403, %v1404
    %v1406 = vld [vmem:[%s9] sm:$0xff]
    %v1407 = vld [vmem:[%s9 + $0x8] sm:$0xff]
    %v1408 = vld [vmem:[%s9 + $0x10] sm:$0xff]
    %v1409 = vld [vmem:[%s9 + $0x18] sm:$0xff]
    %v1410 = vld [vmem:[#allocation12] sm:$0x1]
    %v1412 = vperm.slane %v1410, 0
    %1415 = vrot.lane.b32.xlu0 %v1405, 96
    %v1416 = vpop.permute.xlu0 %1415
    %v1417 = vsel %vm183, %v1416, 0
    %1419 = vmatpush.msra.mxu0 0.0
    %1420 = vmatpush.msra.mxu0 0.0
    %1421 = vmatpush.msra.mxu0 0.0
    %1422 = vmatpush.msra.mxu0 0.0
    %1423 = vmatpush.msra.mxu0 0.0
    %1424 = vmatpush.msra.mxu0 0.0
    %1425 = vmatpush.msra.mxu0 0.0
    %1426 = vmatpush.msra.mxu0 0.0
    %1427 = vmatpush.msra.mxu0 0.0
    %1428 = vmatpush.msra.mxu0 0.0
    %1429 = vmatpush.msra.mxu0 0.0
    %1430 = vmatpush.msra.mxu0 0.0
    %1431 = vmatpush.msra.mxu0 %v1409
    %1432 = vmatpush.msra.mxu0 %v1408
    %1433 = vmatpush.msra.mxu0 %v1407
    %1434 = vmatpush.msra.mxu0 %v1406
    %1435 = vmatmul.f32.gmra.mxu0 %v1417
    %v1436 = vpop.f32.mrf.mxu0
    %v1437 = vadd.f32 %v1412, %v1436
    %1438 = vdwg.mxu0
    %vm1439 = vcmask 123904
    %1440 = vst.msk [vmem:[#allocation14] sm:$0x3] %vm1439, %v1437
    // Predicated region
    $region70: #{random_number_gru_forward.1} parent=1 // pred_check
      _
    $region71: #{random_number_gru_forward.1} parent=1 // pred_check_branch
      %1442 = sbr.rel (0) target = $region73
    $region72: #{random_number_gru_forward.1} parent=1 // pred_region
      %1444 = vsyncadd [#allocation5], 0
      %s1446 = sshll.u32 [#allocation14], 4
      %s1447 = int_to_ptr.vmem [resolvable:$true] %s1446
      %s1448 = sshll.u32 %s11, 4
      %s1449 = int_to_ptr.hbm [resolvable:$true] %s1448
      %1451 = dma.vmem_to_hbm [thread:$0]  %s1447, 32, %s1449, [#allocation5]
    $region73: #{random_number_gru_forward.1} parent=1 // pred_fallthru
      _
    // Predicated region
    $region74: #{random_number_gru_forward.1} parent=1 // pred_check
      _
    $region75: #{random_number_gru_forward.1} parent=1 // pred_check_branch
      %1453 = sbr.rel (0) target = $region77
    $region76: #{random_number_gru_forward.1} parent=1 // pred_region
      %1455 = dma.done [#allocation5], 32
    $region77: #{random_number_gru_forward.1} parent=1 // pred_fallthru
      _
    %1456 = vsyncpa [#allocation4], 1
    %1457 = vsyncpa [#allocation7], 1
    %1458 = vsyncpa [#allocation10], 1
    %1459 = vsyncpa [#allocation13], 1
    %1460 = vsyncpa [#allocation5], 1

</llo_original>
